<compile_context>
chip_gen: v6e
topology: v6e:2x2x1
jax: 0.10.0
libtpu: 0.0.40
codegen_flags: <defaults>
</compile_context>

<pallas_src>
import functools
import math

import numpy as np
import jax
import jax.numpy as jnp
from jax.experimental import pallas as pl
from jax.experimental.pallas import tpu as pltpu

F32 = jnp.float32
BF16 = jnp.bfloat16


# --------------------------- host-side constant tables -----------------------
def rotary_half_tables(T, head_dim, base=10000.0):
    """cos/sin of shape (T, head_dim//2), bf16-rounded like the PyTorch Rotary cache."""
    inv_freq = 1.0 / (base ** (jnp.arange(0, head_dim, 2, dtype=F32) / head_dim))
    t = jnp.arange(T, dtype=F32)
    freqs = jnp.outer(t, inv_freq)                              # (T, hd//2)
    cos = jnp.cos(freqs).astype(BF16).astype(F32)
    sin = jnp.sin(freqs).astype(BF16).astype(F32)
    return cos, sin


def rotary_full_tables(T, head_dim, n_head):
    """(T, C) tables with the rotary sign folded in, so the kernel applies rotary
    full-width as  x * cosC + x_halfswapped * sinC  -- no lane slicing/concats."""
    cos, sin = rotary_half_tables(T, head_dim)
    cos_full = jnp.concatenate([cos, cos], axis=1)              # (T, hd)
    sin_signed = jnp.concatenate([sin, -sin], axis=1)           # (T, hd)
    return jnp.tile(cos_full, (1, n_head)), jnp.tile(sin_signed, (1, n_head))


def half_swap_matrix(n_head, head_dim):
    """(C, C) permutation: (x @ P)[:, j] = x[:, partner(j)], partner swaps the two
    halves of each head (the `rotate_half` needed by rotary).  Folded into w_qkv
    on the host -- never shipped to the kernel."""
    d2 = head_dim // 2
    p = np.zeros((head_dim, head_dim), np.float32)
    for j in range(head_dim):
        p[(j + d2) % head_dim, j] = 1.0
    return jnp.asarray(np.kron(np.eye(n_head), p), F32)


def head_seg_matrices(n_head, head_dim):
    """Factored per-head segment-sum:  ((x*x) @ S1) @ S2 broadcasts each head's
    sum of squares to every lane of that head.  S1:(C,nh), S2:(nh,C)."""
    S1 = jnp.asarray(np.kron(np.eye(n_head), np.ones((head_dim, 1))), F32)
    S2 = jnp.asarray(np.kron(np.eye(n_head), np.ones((1, head_dim))), F32)
    return S1, S2


# --------------------------------- kernel ------------------------------------
def _rms(x, w, eps=1e-5):
    var = jnp.mean(x * x, axis=-1, keepdims=True) + eps
    return x * jax.lax.rsqrt(var) * w


def fused_kernel(seq_ref, w_hs_ref, b_hs_ref, cos_ref, sin_ref, s1_ref, s2_ref,
                 w_rms_ref, w_hd_ref, w_hds_ref, w_qkv_ref, w_proj_ref,
                 w_fc_ref, w_mp_ref, gamma_ref, beta_ref,
                 out_ref, x_scr, y_scr, *, n_head, head_dim):
    C = n_head * head_dim
    l = pl.program_id(1)
    inv_scale = 1.0 / math.sqrt(head_dim)
    inv_hd = 1.0 / head_dim

    # -------- hs_proj (Linear with bias) on the first layer step --------
    @pl.when(l == 0)
    def _():
        x_scr[...] = (jnp.dot(seq_ref[0].astype(BF16), w_hs_ref[...],
                              preferred_element_type=jnp.float32)
                      + b_hs_ref[...])

    x = x_scr[...]                                               # (T, C) f32
    cosC = cos_ref[...]                                          # (T, C)
    sinC = sin_ref[...]                                          # (T, C), sign folded
    w_rms = w_rms_ref[0]                                         # (1, C) shared pre-norm
    w_hd = w_hd_ref[0]                                           # (1, C) head-RMS, tiled
    w_hds = w_hds_ref[0]                                         # (1, C) half-swapped

    # -------- attention branch --------
    h = _rms(x, w_rms).astype(BF16)
    qkv = jnp.dot(h, w_qkv_ref[0], preferred_element_type=jnp.float32)   # (T, 5C)
    q = qkv[:, 0 * C:1 * C]
    k = qkv[:, 1 * C:2 * C]
    v = qkv[:, 2 * C:3 * C].astype(BF16)
    qP = qkv[:, 3 * C:4 * C]                                     # rotate_half(q) stream
    kP = qkv[:, 4 * C:5 * C]                                     # rotate_half(k) stream

    # per-head RMSNorm, full width: per-head sum-of-squares via factored segment-sum
    q_ss = jnp.dot(jnp.dot(q * q, s1_ref[...], preferred_element_type=jnp.float32),
                   s2_ref[...], preferred_element_type=jnp.float32)
    k_ss = jnp.dot(jnp.dot(k * k, s1_ref[...], preferred_element_type=jnp.float32),
                   s2_ref[...], preferred_element_type=jnp.float32)
    rq = jax.lax.rsqrt(q_ss * inv_hd + 1e-5)
    rk = jax.lax.rsqrt(k_ss * inv_hd + 1e-5)

    # rotary, full width: rotate_half came out of the same matmul (P folded into
    # w_qkv); its per-head norm uses the half-swapped RMS weight.
    q_rot = ((q * rq * w_hd) * cosC + (qP * rq * w_hds) * sinC).astype(BF16)
    k_rot = ((k * rk * w_hd) * cosC + (kP * rk * w_hds) * sinC).astype(BF16)

    # per-head attention; head outputs assembled in a VMEM scratch, ONE c_proj matmul
    for hh in range(n_head):                                     # small static unroll
        lo = hh * head_dim
        hi = lo + head_dim
        s = jax.lax.dot_general(q_rot[:, lo:hi], k_rot[:, lo:hi],
                                (((1,), (1,)), ((), ())),
                                preferred_element_type=jnp.float32) * inv_scale
        # NOTE: the all-ones float attn_mask only adds a constant bias that the
        # softmax max-subtraction cancels; nan_to_num can never fire on finite
        # scores -> both dropped (numerically dead work).
        s = s - jnp.max(s, axis=-1, keepdims=True)
        p = jnp.exp(s)
        p = p * pl.reciprocal(jnp.sum(p, axis=-1, keepdims=True), approx=True)
        yh = jnp.dot(p.astype(BF16), v[:, lo:hi],
                     preferred_element_type=jnp.float32)         # (T, hd)
        y_scr[:, lo:hi] = yh.astype(BF16)

    x = x + jnp.dot(y_scr[...], w_proj_ref[0],
                    preferred_element_type=jnp.float32)          # K=C c_proj

    # -------- MLP branch (same RMSNorm weight as the attention pre-norm) ----
    h2 = _rms(x, w_rms).astype(BF16)
    u = jnp.dot(h2, w_fc_ref[0], preferred_element_type=jnp.float32)     # (T, 4C)
    u = jnp.square(jnp.maximum(u, 0.0)).astype(BF16)                     # relu(x)^2
    x = x + jnp.dot(u, w_mp_ref[0], preferred_element_type=jnp.float32)

    x_scr[...] = x

    # -------- final LayerNorm (ln_f) on the last layer step --------
    @pl.when(l == pl.num_programs(1) - 1)
    def _():
        mu = jnp.mean(x, axis=-1, keepdims=True)
        xc = x - mu
        var = jnp.mean(xc * xc, axis=-1, keepdims=True)
        out_ref[0] = xc * jax.lax.rsqrt(var + 1e-5) * gamma_ref[...] + beta_ref[...]


# ------------------------------- wrapper --------------------------------------
def _shared_spec(shape):
    nd = len(shape)
    return pl.BlockSpec(tuple(shape), lambda b, l, _n=nd: (0,) * _n)


def _layer_spec(shape):
    nd = len(shape) - 1
    return pl.BlockSpec((1,) + tuple(shape[1:]), lambda b, l, _n=nd: (l,) + (0,) * _n)


def feature_processor_forward(seq, params, cfg):
    B, T, Cin = seq.shape
    C, nh, L = cfg["n_embd"], cfg["n_head"], cfg["n_layer"]
    hd = C // nh
    d2 = hd // 2

    # constants
    cosC, sinC = rotary_full_tables(T, hd, nh)
    S1, S2 = head_seg_matrices(nh, hd)

    # per-head RMS weight, tiled full width, plus its half-swapped version
    w_hd = params["w_hd"]                                        # (L, 1, hd)
    w_hd_sw = jnp.concatenate([w_hd[..., d2:], w_hd[..., :d2]], axis=-1)
    w_hd_t = jnp.tile(w_hd, (1, 1, nh))                          # (L, 1, C)
    w_hd_sw_t = jnp.tile(w_hd_sw, (1, 1, nh))                    # (L, 1, C)

    # fold the rotate-half permutation into the merged projection: (L, C, 5C)
    P = half_swap_matrix(nh, hd)
    w_q = params["w_qkv"][:, :, :C]
    w_k = params["w_qkv"][:, :, C:2 * C]
    w_qkv5 = jnp.concatenate(
        [params["w_qkv"],
         jnp.einsum("lij,jk->lik", w_q, P),
         jnp.einsum("lij,jk->lik", w_k, P)], axis=-1).astype(BF16)

    shared = [params["w_hs"].astype(BF16), params["b_hs"], cosC, sinC, S1, S2]
    layer = [params["w_rms"], w_hd_t, w_hd_sw_t, w_qkv5,
             params["w_proj"].astype(BF16), params["w_fc"].astype(BF16),
             params["w_mp"].astype(BF16)]
    tail = [params["gamma"], params["beta"]]
    args = [seq] + shared + layer + tail

    in_specs = ([pl.BlockSpec((1, T, Cin), lambda b, l: (b, 0, 0))]
                + [_shared_spec(a.shape) for a in shared]
                + [_layer_spec(a.shape) for a in layer]
                + [_shared_spec(a.shape) for a in tail])

    # explicit VMEM budget from the streamed per-layer footprint (cap 64 MiB for v7x)
    def _nb(a):
        return int(np.prod(a.shape)) * jnp.dtype(a.dtype).itemsize

    per_step_in = (T * Cin * 4
                   + sum(_nb(a) for a in shared + tail)
                   + sum(_nb(a) // L for a in layer))
    out_block = T * C * 4
    scratch_b = T * C * 4 + T * C * 2
    vmem_limit = int(min(max(2 * (per_step_in + out_block) + scratch_b + (2 << 20),
                             16 << 20), 64 << 20))

    flops_layer = (2 * T * C * 5 * C + 2 * T * C * C + 2 * T * C * 4 * C
                   + 2 * T * 4 * C * C + 4 * T * T * C)
    cost = pl.CostEstimate(
        flops=int(B * (2 * T * Cin * C + L * flops_layer)),
        transcendentals=int(B * L * (nh * T * T + 8 * T)),
        bytes_accessed=int(_nb(seq) + B * sum(_nb(a) for a in shared + layer + tail)
                           + B * T * C * 4))

    kern = functools.partial(fused_kernel, n_head=nh, head_dim=hd)
    return pl.pallas_call(
        kern,
        out_shape=jax.ShapeDtypeStruct((B, T, C), F32),
        grid=(B, L),
        in_specs=in_specs,
        out_specs=pl.BlockSpec((1, T, C), lambda b, l: (b, 0, 0)),
        scratch_shapes=[pltpu.VMEM((T, C), F32),      # residual stream carry
                        pltpu.VMEM((T, C), BF16)],    # per-head attention output
        compiler_params=pltpu.CompilerParams(
            dimension_semantics=("parallel", "arbitrary"),
            vmem_limit_bytes=vmem_limit),
        cost_estimate=cost,
    )(*args)


# ------------------------ deterministic parameter init ------------------------
def init_params(key, cfg):
    C, Cout, L = cfg["n_embd"], cfg["out_n_embd"], cfg["n_layer"]
    nh = cfg["n_head"]
    hd = C // nh
    keys = iter(jax.random.split(key, 16))

    def w(shape, scale=0.05):
        return (scale * jax.random.normal(next(keys), shape)).astype(F32)

    # NOTE: PyTorch zero-inits the attn/mlp c_proj weights and ones-inits the norm
    # weights; random values are used so the correctness check is non-trivial.
    return {
        "w_hs": w((Cout, C)), "b_hs": w((1, C)),
        "w_rms": (1.0 + 0.1 * jax.random.normal(next(keys), (L, 1, C))).astype(F32),
        "w_hd": (1.0 + 0.1 * jax.random.normal(next(keys), (L, 1, hd))).astype(F32),
        "w_qkv": w((L, C, 3 * C)),
        "w_proj": w((L, C, C)),
        "w_fc": w((L, C, 4 * C)),
        "w_mp": w((L, 4 * C, C)),
        "gamma": (1.0 + 0.1 * jax.random.normal(next(keys), (1, C))).astype(F32),
        "beta": w((1, C)),
    }


def bf16_rounded_params(params):
    """Matmul weights rounded to bf16 (what the kernel uses on the MXU); norm
    weights / bias stay f32.  The reference uses these so the comparison isolates
    activation-side bf16 casts + approx reciprocal."""
    q = dict(params)
    for k in ("w_hs", "w_qkv", "w_proj", "w_fc", "w_mp"):
        q[k] = params[k].astype(BF16).astype(F32)
    return q


# ---------------------------- pure-JAX reference ------------------------------
def ref_forward(seq, params, cfg):
    C, nh, L = cfg["n_embd"], cfg["n_head"], cfg["n_layer"]
    hd = C // nh
    d2 = hd // 2
    B, T, _ = seq.shape

    x = seq @ params["w_hs"] + params["b_hs"]
    cos, sin = rotary_half_tables(T, hd)
    c4, s4 = cos[None, :, None, :], sin[None, :, None, :]

    def rms(a, wgt):
        var = jnp.mean(a * a, axis=-1, keepdims=True) + 1e-5
        return a * jax.lax.rsqrt(var) * wgt

    for l in range(L):
        wq = params["w_qkv"][l][:, :C]
        wk = params["w_qkv"][l][:, C:2 * C]
        wv = params["w_qkv"][l][:, 2 * C:3 * C]
        w_rms = params["w_rms"][l, 0]
        w_hd = params["w_hd"][l, 0]

        h = rms(x, w_rms)
        q = (h @ wq).reshape(B, T, nh, hd)
        k = (h @ wk).reshape(B, T, nh, hd)
        v = (h @ wv).reshape(B, T, nh, hd)
        q, k = rms(q, w_hd), rms(k, w_hd)

        def rot(a):
            a1, a2 = a[..., :d2], a[..., d2:]
            return jnp.concatenate([a1 * c4 + a2 * s4, -a1 * s4 + a2 * c4], axis=-1)

        q, k = rot(q), rot(k)
        scores = jnp.einsum("bthd,bshd->bhts", q, k) / math.sqrt(hd) + 1.0  # ones mask
        p = jnp.nan_to_num(jax.nn.softmax(scores, axis=-1), nan=0.0)
        y = jnp.einsum("bhts,bshd->bthd", p, v).reshape(B, T, C)
        x = x + y @ params["w_proj"][l]

        h2 = rms(x, w_rms)                       # Block shares one RMSNorm module
        x = x + jnp.square(jax.nn.relu(h2 @ params["w_fc"][l])) @ params["w_mp"][l]

    mu = jnp.mean(x, -1, keepdims=True)
    var = jnp.mean(jnp.square(x - mu), -1, keepdims=True)
    return (x - mu) * jax.lax.rsqrt(var + 1e-5) * params["gamma"] + params["beta"]


# ----------------------------------- main --------------------------------------
if __name__ == "__main__":
    cfg = dict(n_embd=64, n_head=4, n_layer=2, out_n_embd=32)
    B, T = 2, 8

    key = jax.random.PRNGKey(0)
    kp, ks = jax.random.split(key)
    params = init_params(kp, cfg)
    seq = jax.random.normal(ks, (B, T, cfg["out_n_embd"]), dtype=F32)

    out = feature_processor_forward(seq, params, cfg)
    out = jax.block_until_ready(out)

    ref = ref_forward(seq, bf16_rounded_params(params), cfg)
    assert out.shape == (B, T, cfg["n_embd"])
    assert bool(jnp.all(jnp.isfinite(out)))
    # bf16 activation casts + EUP approx reciprocal => 2e-2 tolerance vs exact-math ref
    assert bool(jnp.allclose(out, ref, atol=2e-2, rtol=2e-2)), float(
        jnp.max(jnp.abs(out - ref)))
    print("KERNEL_OK")
</pallas_src>

<mosaic_0001>
module attributes {stable_mosaic.version = 11 : i64} {
  func.func @fused_kernel(%arg0: i32, %arg1: i32, %arg2: memref<1x8x32xf32, #tpu.memory_space<vmem>>, %arg3: memref<32x64xbf16, #tpu.memory_space<vmem>>, %arg4: memref<1x64xf32, #tpu.memory_space<vmem>>, %arg5: memref<8x64xf32, #tpu.memory_space<vmem>>, %arg6: memref<8x64xf32, #tpu.memory_space<vmem>>, %arg7: memref<64x4xf32, #tpu.memory_space<vmem>>, %arg8: memref<4x64xf32, #tpu.memory_space<vmem>>, %arg9: memref<1x1x64xf32, #tpu.memory_space<vmem>>, %arg10: memref<1x1x64xf32, #tpu.memory_space<vmem>>, %arg11: memref<1x1x64xf32, #tpu.memory_space<vmem>>, %arg12: memref<1x64x320xbf16, #tpu.memory_space<vmem>>, %arg13: memref<1x64x64xbf16, #tpu.memory_space<vmem>>, %arg14: memref<1x64x256xbf16, #tpu.memory_space<vmem>>, %arg15: memref<1x256x64xbf16, #tpu.memory_space<vmem>>, %arg16: memref<1x64xf32, #tpu.memory_space<vmem>>, %arg17: memref<1x64xf32, #tpu.memory_space<vmem>>, %arg18: memref<1x8x64xf32, #tpu.memory_space<vmem>>, %arg19: memref<8x64xf32, #tpu.memory_space<vmem>>, %arg20: memref<8x64xbf16, #tpu.memory_space<vmem>>) attributes {dimension_semantics = [#tpu.dimension_semantics<parallel>, #tpu.dimension_semantics<arbitrary>], iteration_bounds = array<i64: 2, 2>, scalar_prefetch = 0 : i64, scratch_operands = 2 : i64, tpu.core_type = #tpu.core_type<tc>, window_params = [{transform_indices = @transform_0, window_bounds = array<i64: 1, 8, 32>}, {pipeline_mode = #tpu.pipeline_mode<synchronous>, transform_indices = @transform_1, window_bounds = array<i64: 32, 64>}, {pipeline_mode = #tpu.pipeline_mode<synchronous>, transform_indices = @transform_2, window_bounds = array<i64: 1, 64>}, {pipeline_mode = #tpu.pipeline_mode<synchronous>, transform_indices = @transform_3, window_bounds = array<i64: 8, 64>}, {pipeline_mode = #tpu.pipeline_mode<synchronous>, transform_indices = @transform_4, window_bounds = array<i64: 8, 64>}, {pipeline_mode = #tpu.pipeline_mode<synchronous>, transform_indices = @transform_5, window_bounds = array<i64: 64, 4>}, {pipeline_mode = #tpu.pipeline_mode<synchronous>, transform_indices = @transform_6, window_bounds = array<i64: 4, 64>}, {transform_indices = @transform_7, window_bounds = array<i64: 1, 1, 64>}, {transform_indices = @transform_8, window_bounds = array<i64: 1, 1, 64>}, {transform_indices = @transform_9, window_bounds = array<i64: 1, 1, 64>}, {transform_indices = @transform_10, window_bounds = array<i64: 1, 64, 320>}, {transform_indices = @transform_11, window_bounds = array<i64: 1, 64, 64>}, {transform_indices = @transform_12, window_bounds = array<i64: 1, 64, 256>}, {transform_indices = @transform_13, window_bounds = array<i64: 1, 256, 64>}, {pipeline_mode = #tpu.pipeline_mode<synchronous>, transform_indices = @transform_14, window_bounds = array<i64: 1, 64>}, {pipeline_mode = #tpu.pipeline_mode<synchronous>, transform_indices = @transform_15, window_bounds = array<i64: 1, 64>}, {transform_indices = @transform_16, window_bounds = array<i64: 1, 8, 64>}]} {
    %c0_i32 = arith.constant 0 : i32
    %0 = arith.cmpi eq, %arg1, %c0_i32 : i32
    %1 = arith.extui %0 : i1 to i32
    %c0_i32_0 = arith.constant 0 : i32
    %2 = arith.cmpi ne, %1, %c0_i32_0 : i32
    scf.if %2 {
      %c0_83 = arith.constant 0 : index
      %c0_84 = arith.constant 0 : index
      %c0_85 = arith.constant 0 : index
      %187 = vector.load %arg2[%c0_83, %c0_84, %c0_85] : memref<1x8x32xf32, #tpu.memory_space<vmem>>, vector<1x8x32xf32>
      %188 = vector.shape_cast %187 : vector<1x8x32xf32> to vector<8x32xf32>
      %189 = arith.truncf %188 : vector<8x32xf32> to vector<8x32xbf16>
      %c0_86 = arith.constant 0 : index
      %c0_87 = arith.constant 0 : index
      %190 = vector.load %arg3[%c0_86, %c0_87] : memref<32x64xbf16, #tpu.memory_space<vmem>>, vector<32x64xbf16>
      %cst_88 = arith.constant dense<0.000000e+00> : vector<8x64xf32>
      %191 = tpu.matmul %189, %190, %cst_88 {dimension_numbers = #tpu.dot_dimension_numbers<[1], [0], [0], [1], [0, 0, 1, 1], [], []>} : vector<8x32xbf16>, vector<32x64xbf16>, vector<8x64xf32> -> vector<8x64xf32>
      %c0_89 = arith.constant 0 : index
      %c0_90 = arith.constant 0 : index
      %192 = vector.load %arg4[%c0_89, %c0_90] : memref<1x64xf32, #tpu.memory_space<vmem>>, vector<1x64xf32>
      %193 = vector.broadcast %192 : vector<1x64xf32> to vector<8x64xf32>
      %194 = arith.addf %191, %193 : vector<8x64xf32>
      %c0_91 = arith.constant 0 : index
      %c0_92 = arith.constant 0 : index
      %195 = vector.load %arg19[%c0_91, %c0_92] : memref<8x64xf32, #tpu.memory_space<vmem>>, vector<8x64xf32>
      tpu.vector_store %arg19[%c0_91, %c0_92], %194 {strides = array<i32>} : memref<8x64xf32, #tpu.memory_space<vmem>>, vector<8x64xf32>,
    } else {
    }
    %c0 = arith.constant 0 : index
    %c0_1 = arith.constant 0 : index
    %3 = vector.load %arg19[%c0, %c0_1] : memref<8x64xf32, #tpu.memory_space<vmem>>, vector<8x64xf32>
    %c0_2 = arith.constant 0 : index
    %c0_3 = arith.constant 0 : index
    %4 = vector.load %arg5[%c0_2, %c0_3] : memref<8x64xf32, #tpu.memory_space<vmem>>, vector<8x64xf32>
    %c0_4 = arith.constant 0 : index
    %c0_5 = arith.constant 0 : index
    %5 = vector.load %arg6[%c0_4, %c0_5] : memref<8x64xf32, #tpu.memory_space<vmem>>, vector<8x64xf32>
    %c0_6 = arith.constant 0 : index
    %c0_7 = arith.constant 0 : index
    %c0_8 = arith.constant 0 : index
    %6 = vector.load %arg9[%c0_6, %c0_7, %c0_8] : memref<1x1x64xf32, #tpu.memory_space<vmem>>, vector<1x1x64xf32>
    %7 = vector.shape_cast %6 : vector<1x1x64xf32> to vector<1x64xf32>
    %c0_9 = arith.constant 0 : index
    %c0_10 = arith.constant 0 : index
    %c0_11 = arith.constant 0 : index
    %8 = vector.load %arg10[%c0_9, %c0_10, %c0_11] : memref<1x1x64xf32, #tpu.memory_space<vmem>>, vector<1x1x64xf32>
    %9 = vector.shape_cast %8 : vector<1x1x64xf32> to vector<1x64xf32>
    %c0_12 = arith.constant 0 : index
    %c0_13 = arith.constant 0 : index
    %c0_14 = arith.constant 0 : index
    %10 = vector.load %arg11[%c0_12, %c0_13, %c0_14] : memref<1x1x64xf32, #tpu.memory_space<vmem>>, vector<1x1x64xf32>
    %11 = vector.shape_cast %10 : vector<1x1x64xf32> to vector<1x64xf32>
    %12 = arith.mulf %3, %3 : vector<8x64xf32>
    %cst = arith.constant dense<0.000000e+00> : vector<8xf32>
    %13 = vector.multi_reduction <add>, %12, %cst [1] : vector<8x64xf32> to vector<8xf32>
    %14 = vector.shape_cast %13 : vector<8xf32> to vector<8x1xf32>
    %cst_15 = arith.constant 6.400000e+01 : f32
    %15 = vector.broadcast %cst_15 : f32 to vector<8x1xf32>
    %16 = arith.divf %14, %15 : vector<8x1xf32>
    %cst_16 = arith.constant 9.99999974E-6 : f32
    %17 = vector.broadcast %cst_16 : f32 to vector<8x1xf32>
    %18 = arith.addf %16, %17 : vector<8x1xf32>
    %19 = math.rsqrt %18 : vector<8x1xf32>
    %20 = vector.broadcast %19 : vector<8x1xf32> to vector<8x64xf32>
    %21 = arith.mulf %3, %20 : vector<8x64xf32>
    %22 = vector.broadcast %7 : vector<1x64xf32> to vector<8x64xf32>
    %23 = arith.mulf %21, %22 : vector<8x64xf32>
    %24 = arith.truncf %23 : vector<8x64xf32> to vector<8x64xbf16>
    %c0_17 = arith.constant 0 : index
    %c0_18 = arith.constant 0 : index
    %c0_19 = arith.constant 0 : index
    %25 = vector.load %arg12[%c0_17, %c0_18, %c0_19] : memref<1x64x320xbf16, #tpu.memory_space<vmem>>, vector<1x64x320xbf16>
    %26 = vector.shape_cast %25 : vector<1x64x320xbf16> to vector<64x320xbf16>
    %cst_20 = arith.constant dense<0.000000e+00> : vector<8x320xf32>
    %27 = tpu.matmul %24, %26, %cst_20 {dimension_numbers = #tpu.dot_dimension_numbers<[1], [0], [0], [1], [0, 0, 1, 1], [], []>} : vector<8x64xbf16>, vector<64x320xbf16>, vector<8x320xf32> -> vector<8x320xf32>
    %28 = vector.extract_strided_slice %27 {offsets = [0, 0], sizes = [8, 64], strides = [1, 1]} : vector<8x320xf32> to vector<8x64xf32>
    %29 = vector.extract_strided_slice %27 {offsets = [0, 64], sizes = [8, 64], strides = [1, 1]} : vector<8x320xf32> to vector<8x64xf32>
    %30 = vector.extract_strided_slice %27 {offsets = [0, 128], sizes = [8, 64], strides = [1, 1]} : vector<8x320xf32> to vector<8x64xf32>
    %31 = arith.truncf %30 : vector<8x64xf32> to vector<8x64xbf16>
    %32 = vector.extract_strided_slice %27 {offsets = [0, 192], sizes = [8, 64], strides = [1, 1]} : vector<8x320xf32> to vector<8x64xf32>
    %33 = vector.extract_strided_slice %27 {offsets = [0, 256], sizes = [8, 64], strides = [1, 1]} : vector<8x320xf32> to vector<8x64xf32>
    %34 = arith.mulf %28, %28 : vector<8x64xf32>
    %c0_21 = arith.constant 0 : index
    %c0_22 = arith.constant 0 : index
    %35 = vector.load %arg7[%c0_21, %c0_22] : memref<64x4xf32, #tpu.memory_space<vmem>>, vector<64x4xf32>
    %cst_23 = arith.constant dense<0.000000e+00> : vector<8x4xf32>
    %36 = tpu.matmul %34, %35, %cst_23 {dimension_numbers = #tpu.dot_dimension_numbers<[1], [0], [0], [1], [0, 0, 1, 1], [], []>} : vector<8x64xf32>, vector<64x4xf32>, vector<8x4xf32> -> vector<8x4xf32>
    %c0_24 = arith.constant 0 : index
    %c0_25 = arith.constant 0 : index
    %37 = vector.load %arg8[%c0_24, %c0_25] : memref<4x64xf32, #tpu.memory_space<vmem>>, vector<4x64xf32>
    %cst_26 = arith.constant dense<0.000000e+00> : vector<8x64xf32>
    %38 = tpu.matmul %36, %37, %cst_26 {dimension_numbers = #tpu.dot_dimension_numbers<[1], [0], [0], [1], [0, 0, 1, 1], [], []>} : vector<8x4xf32>, vector<4x64xf32>, vector<8x64xf32> -> vector<8x64xf32>
    %39 = arith.mulf %29, %29 : vector<8x64xf32>
    %c0_27 = arith.constant 0 : index
    %c0_28 = arith.constant 0 : index
    %40 = vector.load %arg7[%c0_27, %c0_28] : memref<64x4xf32, #tpu.memory_space<vmem>>, vector<64x4xf32>
    %cst_29 = arith.constant dense<0.000000e+00> : vector<8x4xf32>
    %41 = tpu.matmul %39, %40, %cst_29 {dimension_numbers = #tpu.dot_dimension_numbers<[1], [0], [0], [1], [0, 0, 1, 1], [], []>} : vector<8x64xf32>, vector<64x4xf32>, vector<8x4xf32> -> vector<8x4xf32>
    %c0_30 = arith.constant 0 : index
    %c0_31 = arith.constant 0 : index
    %42 = vector.load %arg8[%c0_30, %c0_31] : memref<4x64xf32, #tpu.memory_space<vmem>>, vector<4x64xf32>
    %cst_32 = arith.constant dense<0.000000e+00> : vector<8x64xf32>
    %43 = tpu.matmul %41, %42, %cst_32 {dimension_numbers = #tpu.dot_dimension_numbers<[1], [0], [0], [1], [0, 0, 1, 1], [], []>} : vector<8x4xf32>, vector<4x64xf32>, vector<8x64xf32> -> vector<8x64xf32>
    %cst_33 = arith.constant 6.250000e-02 : f32
    %44 = vector.broadcast %cst_33 : f32 to vector<8x64xf32>
    %45 = arith.mulf %38, %44 : vector<8x64xf32>
    %cst_34 = arith.constant 9.99999974E-6 : f32
    %46 = vector.broadcast %cst_34 : f32 to vector<8x64xf32>
    %47 = arith.addf %45, %46 : vector<8x64xf32>
    %48 = math.rsqrt %47 : vector<8x64xf32>
    %cst_35 = arith.constant 6.250000e-02 : f32
    %49 = vector.broadcast %cst_35 : f32 to vector<8x64xf32>
    %50 = arith.mulf %43, %49 : vector<8x64xf32>
    %cst_36 = arith.constant 9.99999974E-6 : f32
    %51 = vector.broadcast %cst_36 : f32 to vector<8x64xf32>
    %52 = arith.addf %50, %51 : vector<8x64xf32>
    %53 = math.rsqrt %52 : vector<8x64xf32>
    %54 = arith.mulf %28, %48 : vector<8x64xf32>
    %55 = vector.broadcast %9 : vector<1x64xf32> to vector<8x64xf32>
    %56 = arith.mulf %54, %55 : vector<8x64xf32>
    %57 = arith.mulf %56, %4 : vector<8x64xf32>
    %58 = arith.mulf %32, %48 : vector<8x64xf32>
    %59 = vector.broadcast %11 : vector<1x64xf32> to vector<8x64xf32>
    %60 = arith.mulf %58, %59 : vector<8x64xf32>
    %61 = arith.mulf %60, %5 : vector<8x64xf32>
    %62 = arith.addf %57, %61 : vector<8x64xf32>
    %63 = arith.truncf %62 : vector<8x64xf32> to vector<8x64xbf16>
    %64 = arith.mulf %29, %53 : vector<8x64xf32>
    %65 = vector.broadcast %9 : vector<1x64xf32> to vector<8x64xf32>
    %66 = arith.mulf %64, %65 : vector<8x64xf32>
    %67 = arith.mulf %66, %4 : vector<8x64xf32>
    %68 = arith.mulf %33, %53 : vector<8x64xf32>
    %69 = vector.broadcast %11 : vector<1x64xf32> to vector<8x64xf32>
    %70 = arith.mulf %68, %69 : vector<8x64xf32>
    %71 = arith.mulf %70, %5 : vector<8x64xf32>
    %72 = arith.addf %67, %71 : vector<8x64xf32>
    %73 = arith.truncf %72 : vector<8x64xf32> to vector<8x64xbf16>
    %74 = vector.extract_strided_slice %63 {offsets = [0, 0], sizes = [8, 16], strides = [1, 1]} : vector<8x64xbf16> to vector<8x16xbf16>
    %75 = vector.extract_strided_slice %73 {offsets = [0, 0], sizes = [8, 16], strides = [1, 1]} : vector<8x64xbf16> to vector<8x16xbf16>
    %cst_37 = arith.constant dense<0.000000e+00> : vector<8x8xf32>
    %76 = tpu.matmul %74, %75, %cst_37 {dimension_numbers = #tpu.dot_dimension_numbers<[1], [1], [0], [0], [0, 0, 1, 0], [], []>} : vector<8x16xbf16>, vector<8x16xbf16>, vector<8x8xf32> -> vector<8x8xf32>
    %cst_38 = arith.constant 2.500000e-01 : f32
    %77 = vector.broadcast %cst_38 : f32 to vector<8x8xf32>
    %78 = arith.mulf %76, %77 : vector<8x8xf32>
    %cst_39 = arith.constant dense<0xFF800000> : vector<8xf32>
    %79 = vector.multi_reduction <maximumf>, %78, %cst_39 [1] : vector<8x8xf32> to vector<8xf32>
    %80 = vector.shape_cast %79 : vector<8xf32> to vector<8x1xf32>
    %81 = vector.broadcast %80 : vector<8x1xf32> to vector<8x8xf32>
    %82 = arith.subf %78, %81 : vector<8x8xf32>
    %83 = math.exp %82 : vector<8x8xf32>
    %cst_40 = arith.constant dense<0.000000e+00> : vector<8xf32>
    %84 = vector.multi_reduction <add>, %83, %cst_40 [1] : vector<8x8xf32> to vector<8xf32>
    %85 = vector.shape_cast %84 : vector<8xf32> to vector<8x1xf32>
    %86 = tpu.reciprocal %85 {approx = true} : vector<8x1xf32> -> vector<8x1xf32>
    %87 = vector.broadcast %86 : vector<8x1xf32> to vector<8x8xf32>
    %88 = arith.mulf %83, %87 : vector<8x8xf32>
    %89 = arith.truncf %88 : vector<8x8xf32> to vector<8x8xbf16>
    %90 = vector.extract_strided_slice %31 {offsets = [0, 0], sizes = [8, 16], strides = [1, 1]} : vector<8x64xbf16> to vector<8x16xbf16>
    %cst_41 = arith.constant dense<0.000000e+00> : vector<8x16xf32>
    %91 = tpu.matmul %89, %90, %cst_41 {dimension_numbers = #tpu.dot_dimension_numbers<[1], [0], [0], [1], [0, 0, 1, 1], [], []>} : vector<8x8xbf16>, vector<8x16xbf16>, vector<8x16xf32> -> vector<8x16xf32>
    %92 = arith.truncf %91 : vector<8x16xf32> to vector<8x16xbf16>
    %c0_42 = arith.constant 0 : index
    %c0_43 = arith.constant 0 : index
    %93 = vector.load %arg20[%c0_42, %c0_43] : memref<8x64xbf16, #tpu.memory_space<vmem>>, vector<8x16xbf16>
    tpu.vector_store %arg20[%c0_42, %c0_43], %92 {strides = array<i32>} : memref<8x64xbf16, #tpu.memory_space<vmem>>, vector<8x16xbf16>,
    %94 = vector.extract_strided_slice %63 {offsets = [0, 16], sizes = [8, 16], strides = [1, 1]} : vector<8x64xbf16> to vector<8x16xbf16>
    %95 = vector.extract_strided_slice %73 {offsets = [0, 16], sizes = [8, 16], strides = [1, 1]} : vector<8x64xbf16> to vector<8x16xbf16>
    %cst_44 = arith.constant dense<0.000000e+00> : vector<8x8xf32>
    %96 = tpu.matmul %94, %95, %cst_44 {dimension_numbers = #tpu.dot_dimension_numbers<[1], [1], [0], [0], [0, 0, 1, 0], [], []>} : vector<8x16xbf16>, vector<8x16xbf16>, vector<8x8xf32> -> vector<8x8xf32>
    %cst_45 = arith.constant 2.500000e-01 : f32
    %97 = vector.broadcast %cst_45 : f32 to vector<8x8xf32>
    %98 = arith.mulf %96, %97 : vector<8x8xf32>
    %cst_46 = arith.constant dense<0xFF800000> : vector<8xf32>
    %99 = vector.multi_reduction <maximumf>, %98, %cst_46 [1] : vector<8x8xf32> to vector<8xf32>
    %100 = vector.shape_cast %99 : vector<8xf32> to vector<8x1xf32>
    %101 = vector.broadcast %100 : vector<8x1xf32> to vector<8x8xf32>
    %102 = arith.subf %98, %101 : vector<8x8xf32>
    %103 = math.exp %102 : vector<8x8xf32>
    %cst_47 = arith.constant dense<0.000000e+00> : vector<8xf32>
    %104 = vector.multi_reduction <add>, %103, %cst_47 [1] : vector<8x8xf32> to vector<8xf32>
    %105 = vector.shape_cast %104 : vector<8xf32> to vector<8x1xf32>
    %106 = tpu.reciprocal %105 {approx = true} : vector<8x1xf32> -> vector<8x1xf32>
    %107 = vector.broadcast %106 : vector<8x1xf32> to vector<8x8xf32>
    %108 = arith.mulf %103, %107 : vector<8x8xf32>
    %109 = arith.truncf %108 : vector<8x8xf32> to vector<8x8xbf16>
    %110 = vector.extract_strided_slice %31 {offsets = [0, 16], sizes = [8, 16], strides = [1, 1]} : vector<8x64xbf16> to vector<8x16xbf16>
    %cst_48 = arith.constant dense<0.000000e+00> : vector<8x16xf32>
    %111 = tpu.matmul %109, %110, %cst_48 {dimension_numbers = #tpu.dot_dimension_numbers<[1], [0], [0], [1], [0, 0, 1, 1], [], []>} : vector<8x8xbf16>, vector<8x16xbf16>, vector<8x16xf32> -> vector<8x16xf32>
    %112 = arith.truncf %111 : vector<8x16xf32> to vector<8x16xbf16>
    %c0_49 = arith.constant 0 : index
    %c16 = arith.constant 16 : index
    %113 = vector.load %arg20[%c0_49, %c16] : memref<8x64xbf16, #tpu.memory_space<vmem>>, vector<8x16xbf16>
    tpu.vector_store %arg20[%c0_49, %c16], %112 {strides = array<i32>} : memref<8x64xbf16, #tpu.memory_space<vmem>>, vector<8x16xbf16>,
    %114 = vector.extract_strided_slice %63 {offsets = [0, 32], sizes = [8, 16], strides = [1, 1]} : vector<8x64xbf16> to vector<8x16xbf16>
    %115 = vector.extract_strided_slice %73 {offsets = [0, 32], sizes = [8, 16], strides = [1, 1]} : vector<8x64xbf16> to vector<8x16xbf16>
    %cst_50 = arith.constant dense<0.000000e+00> : vector<8x8xf32>
    %116 = tpu.matmul %114, %115, %cst_50 {dimension_numbers = #tpu.dot_dimension_numbers<[1], [1], [0], [0], [0, 0, 1, 0], [], []>} : vector<8x16xbf16>, vector<8x16xbf16>, vector<8x8xf32> -> vector<8x8xf32>
    %cst_51 = arith.constant 2.500000e-01 : f32
    %117 = vector.broadcast %cst_51 : f32 to vector<8x8xf32>
    %118 = arith.mulf %116, %117 : vector<8x8xf32>
    %cst_52 = arith.constant dense<0xFF800000> : vector<8xf32>
    %119 = vector.multi_reduction <maximumf>, %118, %cst_52 [1] : vector<8x8xf32> to vector<8xf32>
    %120 = vector.shape_cast %119 : vector<8xf32> to vector<8x1xf32>
    %121 = vector.broadcast %120 : vector<8x1xf32> to vector<8x8xf32>
    %122 = arith.subf %118, %121 : vector<8x8xf32>
    %123 = math.exp %122 : vector<8x8xf32>
    %cst_53 = arith.constant dense<0.000000e+00> : vector<8xf32>
    %124 = vector.multi_reduction <add>, %123, %cst_53 [1] : vector<8x8xf32> to vector<8xf32>
    %125 = vector.shape_cast %124 : vector<8xf32> to vector<8x1xf32>
    %126 = tpu.reciprocal %125 {approx = true} : vector<8x1xf32> -> vector<8x1xf32>
    %127 = vector.broadcast %126 : vector<8x1xf32> to vector<8x8xf32>
    %128 = arith.mulf %123, %127 : vector<8x8xf32>
    %129 = arith.truncf %128 : vector<8x8xf32> to vector<8x8xbf16>
    %130 = vector.extract_strided_slice %31 {offsets = [0, 32], sizes = [8, 16], strides = [1, 1]} : vector<8x64xbf16> to vector<8x16xbf16>
    %cst_54 = arith.constant dense<0.000000e+00> : vector<8x16xf32>
    %131 = tpu.matmul %129, %130, %cst_54 {dimension_numbers = #tpu.dot_dimension_numbers<[1], [0], [0], [1], [0, 0, 1, 1], [], []>} : vector<8x8xbf16>, vector<8x16xbf16>, vector<8x16xf32> -> vector<8x16xf32>
    %132 = arith.truncf %131 : vector<8x16xf32> to vector<8x16xbf16>
    %c0_55 = arith.constant 0 : index
    %c32 = arith.constant 32 : index
    %133 = vector.load %arg20[%c0_55, %c32] : memref<8x64xbf16, #tpu.memory_space<vmem>>, vector<8x16xbf16>
    tpu.vector_store %arg20[%c0_55, %c32], %132 {strides = array<i32>} : memref<8x64xbf16, #tpu.memory_space<vmem>>, vector<8x16xbf16>,
    %134 = vector.extract_strided_slice %63 {offsets = [0, 48], sizes = [8, 16], strides = [1, 1]} : vector<8x64xbf16> to vector<8x16xbf16>
    %135 = vector.extract_strided_slice %73 {offsets = [0, 48], sizes = [8, 16], strides = [1, 1]} : vector<8x64xbf16> to vector<8x16xbf16>
    %cst_56 = arith.constant dense<0.000000e+00> : vector<8x8xf32>
    %136 = tpu.matmul %134, %135, %cst_56 {dimension_numbers = #tpu.dot_dimension_numbers<[1], [1], [0], [0], [0, 0, 1, 0], [], []>} : vector<8x16xbf16>, vector<8x16xbf16>, vector<8x8xf32> -> vector<8x8xf32>
    %cst_57 = arith.constant 2.500000e-01 : f32
    %137 = vector.broadcast %cst_57 : f32 to vector<8x8xf32>
    %138 = arith.mulf %136, %137 : vector<8x8xf32>
    %cst_58 = arith.constant dense<0xFF800000> : vector<8xf32>
    %139 = vector.multi_reduction <maximumf>, %138, %cst_58 [1] : vector<8x8xf32> to vector<8xf32>
    %140 = vector.shape_cast %139 : vector<8xf32> to vector<8x1xf32>
    %141 = vector.broadcast %140 : vector<8x1xf32> to vector<8x8xf32>
    %142 = arith.subf %138, %141 : vector<8x8xf32>
    %143 = math.exp %142 : vector<8x8xf32>
    %cst_59 = arith.constant dense<0.000000e+00> : vector<8xf32>
    %144 = vector.multi_reduction <add>, %143, %cst_59 [1] : vector<8x8xf32> to vector<8xf32>
    %145 = vector.shape_cast %144 : vector<8xf32> to vector<8x1xf32>
    %146 = tpu.reciprocal %145 {approx = true} : vector<8x1xf32> -> vector<8x1xf32>
    %147 = vector.broadcast %146 : vector<8x1xf32> to vector<8x8xf32>
    %148 = arith.mulf %143, %147 : vector<8x8xf32>
    %149 = arith.truncf %148 : vector<8x8xf32> to vector<8x8xbf16>
    %150 = vector.extract_strided_slice %31 {offsets = [0, 48], sizes = [8, 16], strides = [1, 1]} : vector<8x64xbf16> to vector<8x16xbf16>
    %cst_60 = arith.constant dense<0.000000e+00> : vector<8x16xf32>
    %151 = tpu.matmul %149, %150, %cst_60 {dimension_numbers = #tpu.dot_dimension_numbers<[1], [0], [0], [1], [0, 0, 1, 1], [], []>} : vector<8x8xbf16>, vector<8x16xbf16>, vector<8x16xf32> -> vector<8x16xf32>
    %152 = arith.truncf %151 : vector<8x16xf32> to vector<8x16xbf16>
    %c0_61 = arith.constant 0 : index
    %c48 = arith.constant 48 : index
    %153 = vector.load %arg20[%c0_61, %c48] : memref<8x64xbf16, #tpu.memory_space<vmem>>, vector<8x16xbf16>
    tpu.vector_store %arg20[%c0_61, %c48], %152 {strides = array<i32>} : memref<8x64xbf16, #tpu.memory_space<vmem>>, vector<8x16xbf16>,
    %c0_62 = arith.constant 0 : index
    %c0_63 = arith.constant 0 : index
    %154 = vector.load %arg20[%c0_62, %c0_63] : memref<8x64xbf16, #tpu.memory_space<vmem>>, vector<8x64xbf16>
    %c0_64 = arith.constant 0 : index
    %c0_65 = arith.constant 0 : index
    %c0_66 = arith.constant 0 : index
    %155 = vector.load %arg13[%c0_64, %c0_65, %c0_66] : memref<1x64x64xbf16, #tpu.memory_space<vmem>>, vector<1x64x64xbf16>
    %156 = vector.shape_cast %155 : vector<1x64x64xbf16> to vector<64x64xbf16>
    %cst_67 = arith.constant dense<0.000000e+00> : vector<8x64xf32>
    %157 = tpu.matmul %154, %156, %cst_67 {dimension_numbers = #tpu.dot_dimension_numbers<[1], [0], [0], [1], [0, 0, 1, 1], [], []>} : vector<8x64xbf16>, vector<64x64xbf16>, vector<8x64xf32> -> vector<8x64xf32>
    %158 = arith.addf %3, %157 : vector<8x64xf32>
    %159 = arith.mulf %158, %158 : vector<8x64xf32>
    %cst_68 = arith.constant dense<0.000000e+00> : vector<8xf32>
    %160 = vector.multi_reduction <add>, %159, %cst_68 [1] : vector<8x64xf32> to vector<8xf32>
    %161 = vector.shape_cast %160 : vector<8xf32> to vector<8x1xf32>
    %cst_69 = arith.constant 6.400000e+01 : f32
    %162 = vector.broadcast %cst_69 : f32 to vector<8x1xf32>
    %163 = arith.divf %161, %162 : vector<8x1xf32>
    %cst_70 = arith.constant 9.99999974E-6 : f32
    %164 = vector.broadcast %cst_70 : f32 to vector<8x1xf32>
    %165 = arith.addf %163, %164 : vector<8x1xf32>
    %166 = math.rsqrt %165 : vector<8x1xf32>
    %167 = vector.broadcast %166 : vector<8x1xf32> to vector<8x64xf32>
    %168 = arith.mulf %158, %167 : vector<8x64xf32>
    %169 = vector.broadcast %7 : vector<1x64xf32> to vector<8x64xf32>
    %170 = arith.mulf %168, %169 : vector<8x64xf32>
    %171 = arith.truncf %170 : vector<8x64xf32> to vector<8x64xbf16>
    %c0_71 = arith.constant 0 : index
    %c0_72 = arith.constant 0 : index
    %c0_73 = arith.constant 0 : index
    %172 = vector.load %arg14[%c0_71, %c0_72, %c0_73] : memref<1x64x256xbf16, #tpu.memory_space<vmem>>, vector<1x64x256xbf16>
    %173 = vector.shape_cast %172 : vector<1x64x256xbf16> to vector<64x256xbf16>
    %cst_74 = arith.constant dense<0.000000e+00> : vector<8x256xf32>
    %174 = tpu.matmul %171, %173, %cst_74 {dimension_numbers = #tpu.dot_dimension_numbers<[1], [0], [0], [1], [0, 0, 1, 1], [], []>} : vector<8x64xbf16>, vector<64x256xbf16>, vector<8x256xf32> -> vector<8x256xf32>
    %cst_75 = arith.constant 0.000000e+00 : f32
    %175 = vector.broadcast %cst_75 : f32 to vector<8x256xf32>
    %176 = arith.maximumf %174, %175 : vector<8x256xf32>
    %177 = arith.mulf %176, %176 : vector<8x256xf32>
    %178 = arith.truncf %177 : vector<8x256xf32> to vector<8x256xbf16>
    %c0_76 = arith.constant 0 : index
    %c0_77 = arith.constant 0 : index
    %c0_78 = arith.constant 0 : index
    %179 = vector.load %arg15[%c0_76, %c0_77, %c0_78] : memref<1x256x64xbf16, #tpu.memory_space<vmem>>, vector<1x256x64xbf16>
    %180 = vector.shape_cast %179 : vector<1x256x64xbf16> to vector<256x64xbf16>
    %cst_79 = arith.constant dense<0.000000e+00> : vector<8x64xf32>
    %181 = tpu.matmul %178, %180, %cst_79 {dimension_numbers = #tpu.dot_dimension_numbers<[1], [0], [0], [1], [0, 0, 1, 1], [], []>} : vector<8x256xbf16>, vector<256x64xbf16>, vector<8x64xf32> -> vector<8x64xf32>
    %182 = arith.addf %158, %181 : vector<8x64xf32>
    %c0_80 = arith.constant 0 : index
    %c0_81 = arith.constant 0 : index
    %183 = vector.load %arg19[%c0_80, %c0_81] : memref<8x64xf32, #tpu.memory_space<vmem>>, vector<8x64xf32>
    tpu.vector_store %arg19[%c0_80, %c0_81], %182 {strides = array<i32>} : memref<8x64xf32, #tpu.memory_space<vmem>>, vector<8x64xf32>,
    %c1_i32 = arith.constant 1 : i32
    %184 = arith.cmpi eq, %arg1, %c1_i32 : i32
    %185 = arith.extui %184 : i1 to i32
    %c0_i32_82 = arith.constant 0 : i32
    %186 = arith.cmpi ne, %185, %c0_i32_82 : i32
    scf.if %186 {
      %cst_83 = arith.constant dense<0.000000e+00> : vector<8xf32>
      %187 = vector.multi_reduction <add>, %182, %cst_83 [1] : vector<8x64xf32> to vector<8xf32>
      %188 = vector.shape_cast %187 : vector<8xf32> to vector<8x1xf32>
      %cst_84 = arith.constant 6.400000e+01 : f32
      %189 = vector.broadcast %cst_84 : f32 to vector<8x1xf32>
      %190 = arith.divf %188, %189 : vector<8x1xf32>
      %191 = vector.broadcast %190 : vector<8x1xf32> to vector<8x64xf32>
      %192 = arith.subf %182, %191 : vector<8x64xf32>
      %193 = arith.mulf %192, %192 : vector<8x64xf32>
      %cst_85 = arith.constant dense<0.000000e+00> : vector<8xf32>
      %194 = vector.multi_reduction <add>, %193, %cst_85 [1] : vector<8x64xf32> to vector<8xf32>
      %195 = vector.shape_cast %194 : vector<8xf32> to vector<8x1xf32>
      %cst_86 = arith.constant 6.400000e+01 : f32
      %196 = vector.broadcast %cst_86 : f32 to vector<8x1xf32>
      %197 = arith.divf %195, %196 : vector<8x1xf32>
      %cst_87 = arith.constant 9.99999974E-6 : f32
      %198 = vector.broadcast %cst_87 : f32 to vector<8x1xf32>
      %199 = arith.addf %197, %198 : vector<8x1xf32>
      %200 = math.rsqrt %199 : vector<8x1xf32>
      %201 = vector.broadcast %200 : vector<8x1xf32> to vector<8x64xf32>
      %202 = arith.mulf %192, %201 : vector<8x64xf32>
      %c0_88 = arith.constant 0 : index
      %c0_89 = arith.constant 0 : index
      %203 = vector.load %arg16[%c0_88, %c0_89] : memref<1x64xf32, #tpu.memory_space<vmem>>, vector<1x64xf32>
      %204 = vector.broadcast %203 : vector<1x64xf32> to vector<8x64xf32>
      %205 = arith.mulf %202, %204 : vector<8x64xf32>
      %c0_90 = arith.constant 0 : index
      %c0_91 = arith.constant 0 : index
      %206 = vector.load %arg17[%c0_90, %c0_91] : memref<1x64xf32, #tpu.memory_space<vmem>>, vector<1x64xf32>
      %207 = vector.broadcast %206 : vector<1x64xf32> to vector<8x64xf32>
      %208 = arith.addf %205, %207 : vector<8x64xf32>
      %c0_92 = arith.constant 0 : index
      %c0_93 = arith.constant 0 : index
      %c0_94 = arith.constant 0 : index
      %209 = vector.load %arg18[%c0_92, %c0_93, %c0_94] : memref<1x8x64xf32, #tpu.memory_space<vmem>>, vector<1x8x64xf32>
      %210 = vector.shape_cast %209 : vector<1x8x64xf32> to vector<8x64xf32>
      %211 = vector.shape_cast %208 : vector<8x64xf32> to vector<1x8x64xf32>
      tpu.vector_store %arg18[%c0_92, %c0_93, %c0_94], %211 {strides = array<i32>} : memref<1x8x64xf32, #tpu.memory_space<vmem>>, vector<1x8x64xf32>,
    } else {
    }
    return
  }
  func.func @transform_0(%arg0: i32, %arg1: i32) -> (i32, i32, i32) {
    %c0_i32 = arith.constant 0 : i32
    %c0_i32_0 = arith.constant 0 : i32
    %c0_i32_1 = arith.constant 0 : i32
    return %arg0, %c0_i32, %c0_i32_0 : i32, i32, i32
  }
  func.func @transform_1(%arg0: i32, %arg1: i32) -> (i32, i32) {
    %c0_i32 = arith.constant 0 : i32
    %c0_i32_0 = arith.constant 0 : i32
    %c0_i32_1 = arith.constant 0 : i32
    return %c0_i32, %c0_i32_0 : i32, i32
  }
  func.func @transform_2(%arg0: i32, %arg1: i32) -> (i32, i32) {
    %c0_i32 = arith.constant 0 : i32
    %c0_i32_0 = arith.constant 0 : i32
    %c0_i32_1 = arith.constant 0 : i32
    return %c0_i32, %c0_i32_0 : i32, i32
  }
  func.func @transform_3(%arg0: i32, %arg1: i32) -> (i32, i32) {
    %c0_i32 = arith.constant 0 : i32
    %c0_i32_0 = arith.constant 0 : i32
    %c0_i32_1 = arith.constant 0 : i32
    return %c0_i32, %c0_i32_0 : i32, i32
  }
  func.func @transform_4(%arg0: i32, %arg1: i32) -> (i32, i32) {
    %c0_i32 = arith.constant 0 : i32
    %c0_i32_0 = arith.constant 0 : i32
    %c0_i32_1 = arith.constant 0 : i32
    return %c0_i32, %c0_i32_0 : i32, i32
  }
  func.func @transform_5(%arg0: i32, %arg1: i32) -> (i32, i32) {
    %c0_i32 = arith.constant 0 : i32
    %c0_i32_0 = arith.constant 0 : i32
    %c0_i32_1 = arith.constant 0 : i32
    return %c0_i32, %c0_i32_0 : i32, i32
  }
  func.func @transform_6(%arg0: i32, %arg1: i32) -> (i32, i32) {
    %c0_i32 = arith.constant 0 : i32
    %c0_i32_0 = arith.constant 0 : i32
    %c0_i32_1 = arith.constant 0 : i32
    return %c0_i32, %c0_i32_0 : i32, i32
  }
  func.func @transform_7(%arg0: i32, %arg1: i32) -> (i32, i32, i32) {
    %c0_i32 = arith.constant 0 : i32
    %c0_i32_0 = arith.constant 0 : i32
    %c0_i32_1 = arith.constant 0 : i32
    return %arg1, %c0_i32, %c0_i32_0 : i32, i32, i32
  }
  func.func @transform_8(%arg0: i32, %arg1: i32) -> (i32, i32, i32) {
    %c0_i32 = arith.constant 0 : i32
    %c0_i32_0 = arith.constant 0 : i32
    %c0_i32_1 = arith.constant 0 : i32
    return %arg1, %c0_i32, %c0_i32_0 : i32, i32, i32
  }
  func.func @transform_9(%arg0: i32, %arg1: i32) -> (i32, i32, i32) {
    %c0_i32 = arith.constant 0 : i32
    %c0_i32_0 = arith.constant 0 : i32
    %c0_i32_1 = arith.constant 0 : i32
    return %arg1, %c0_i32, %c0_i32_0 : i32, i32, i32
  }
  func.func @transform_10(%arg0: i32, %arg1: i32) -> (i32, i32, i32) {
    %c0_i32 = arith.constant 0 : i32
    %c0_i32_0 = arith.constant 0 : i32
    %c0_i32_1 = arith.constant 0 : i32
    return %arg1, %c0_i32, %c0_i32_0 : i32, i32, i32
  }
  func.func @transform_11(%arg0: i32, %arg1: i32) -> (i32, i32, i32) {
    %c0_i32 = arith.constant 0 : i32
    %c0_i32_0 = arith.constant 0 : i32
    %c0_i32_1 = arith.constant 0 : i32
    return %arg1, %c0_i32, %c0_i32_0 : i32, i32, i32
  }
  func.func @transform_12(%arg0: i32, %arg1: i32) -> (i32, i32, i32) {
    %c0_i32 = arith.constant 0 : i32
    %c0_i32_0 = arith.constant 0 : i32
    %c0_i32_1 = arith.constant 0 : i32
    return %arg1, %c0_i32, %c0_i32_0 : i32, i32, i32
  }
  func.func @transform_13(%arg0: i32, %arg1: i32) -> (i32, i32, i32) {
    %c0_i32 = arith.constant 0 : i32
    %c0_i32_0 = arith.constant 0 : i32
    %c0_i32_1 = arith.constant 0 : i32
    return %arg1, %c0_i32, %c0_i32_0 : i32, i32, i32
  }
  func.func @transform_14(%arg0: i32, %arg1: i32) -> (i32, i32) {
    %c0_i32 = arith.constant 0 : i32
    %c0_i32_0 = arith.constant 0 : i32
    %c0_i32_1 = arith.constant 0 : i32
    return %c0_i32, %c0_i32_0 : i32, i32
  }
  func.func @transform_15(%arg0: i32, %arg1: i32) -> (i32, i32) {
    %c0_i32 = arith.constant 0 : i32
    %c0_i32_0 = arith.constant 0 : i32
    %c0_i32_1 = arith.constant 0 : i32
    return %c0_i32, %c0_i32_0 : i32, i32
  }
  func.func @transform_16(%arg0: i32, %arg1: i32) -> (i32, i32, i32) {
    %c0_i32 = arith.constant 0 : i32
    %c0_i32_0 = arith.constant 0 : i32
    %c0_i32_1 = arith.constant 0 : i32
    return %arg0, %c0_i32, %c0_i32_0 : i32, i32, i32
  }
}

</mosaic_0001>

<llo_original>
// kernel: tpu_custom_call.1
$region0: #{tpu_custom_call.1}
  #allocation0 [shape = 'u32[]', space=smem, size = 0x4, offset = 0x4, fixed_abs, tag = 'smem constant byte address 0x4 - core index']
  #allocation1 [shape = 'u32[144,128]{1,0:T(1,128)}', space=vmem, size = 0x12000, scoped, tag = 'internal scratch']
  #allocation2 [shape = 'f32[8,64]{1,0:T(8,128)}', space=vmem, size = 0x1000, scoped, tag = 'scratch operand']
  #allocation3 [shape = 'bf16[8,64]{1,0:T(8,128)(2,1)}', space=vmem, size = 0x800, scoped, tag = 'scratch operand']
  %s0 = inlined_call_operand.vmem [shape: f32[2,8,32], index: 0, kind: input, shape index: {}]
  %s1 = inlined_call_operand.vmem [shape: bf16[32,64], index: 1, kind: input, shape index: {}]
  %s2 = inlined_call_operand.vmem [shape: f32[1,64], index: 2, kind: input, shape index: {}]
  %s3 = inlined_call_operand.vmem [shape: f32[8,64], index: 3, kind: input, shape index: {}]
  %s4 = inlined_call_operand.vmem [shape: f32[8,64], index: 4, kind: input, shape index: {}]
  %s5 = inlined_call_operand.vmem [shape: f32[64,4], index: 5, kind: input, shape index: {}]
  %s6 = inlined_call_operand.vmem [shape: f32[4,64], index: 6, kind: input, shape index: {}]
  %s7 = inlined_call_operand.vmem [shape: f32[2,1,64], index: 7, kind: input, shape index: {}]
  %s8 = inlined_call_operand.vmem [shape: f32[2,1,64], index: 8, kind: input, shape index: {}]
  %s9 = inlined_call_operand.vmem [shape: f32[2,1,64], index: 9, kind: input, shape index: {}]
  %s10 = inlined_call_operand.vmem [shape: bf16[2,64,320], index: 10, kind: input, shape index: {}]
  %s11 = inlined_call_operand.vmem [shape: bf16[2,64,64], index: 11, kind: input, shape index: {}]
  %s12 = inlined_call_operand.vmem [shape: bf16[2,64,256], index: 12, kind: input, shape index: {}]
  %s13 = inlined_call_operand.vmem [shape: bf16[2,256,64], index: 13, kind: input, shape index: {}]
  %s14 = inlined_call_operand.vmem [shape: f32[1,64], index: 14, kind: input, shape index: {}]
  %s15 = inlined_call_operand.vmem [shape: f32[1,64], index: 15, kind: input, shape index: {}]
  %s16 = inlined_call_operand.hbm [shape: f32[2,8,64], index: 16, kind: output, shape index: {}]
  %s17 = sld [smem:[#allocation0]]
  $region105: #{tpu_custom_call.1} parent=0
    _
  %s19 = ssub.s32 1, %s17
  %s20 = scalar_select 0, %s19, %s17
  $region1: #{tpu_custom_call.1} parent=0
    #allocation4 [shape = 'u8[8192]{0}', space=vmem, size = 0x2000, scoped, tag = 'output window, operand 0']
    #allocation5 [shape = 's32[2]{0}', space=sflag, size = 0x8, scoped, tag = 'scoped memory for tpu_custom_call.1']
    %21 = vsyncpa [#allocation5], 0
    %s22 = scalar_lea.sflag [#allocation5], 1
    %23 = vsyncpa %s22, 0
    loop: start=0, step=1, limit=6
    $region2: #{tpu_custom_call.1} parent=1 // loop_pre_header
      _
    $region3: #{tpu_custom_call.1} parent=1 // loop_header
      %s25 = sphi 0, %s29
      %p26 = scmp.ge.s32.totalorder %s25, 6
      %s32 = sphi 0, %s44
      %s33 = sphi 0, %s40
      %s34 = sphi 0, %s32
      %s35 = sphi 0, %s33
      %s36 = sphi 0, %s34
      %s37 = sphi 0, %s35
      %s47 = sphi 0, %s49
      %s50 = sphi 0, %s47
      %s51 = sphi 0, %s50
      %s67 = sphi 0, %s51
      %s71 = sphi 0, %s71
      %s73 = sphi 0, %s71
      %s74 = sphi 0, %s73
      %s88 = sphi 0, %s74
      %s92 = sphi 0, %s92
      %s94 = sphi 0, %s92
      %s95 = sphi 0, %s94
      %s109 = sphi 0, %s95
      %s113 = sphi 0, %s113
      %s115 = sphi 0, %s113
      %s116 = sphi 0, %s115
      %s130 = sphi 0, %s116
      %s134 = sphi 0, %s134
      %s136 = sphi 0, %s134
      %s137 = sphi 0, %s136
      %s151 = sphi 0, %s137
      %s155 = sphi 0, %s155
      %s157 = sphi 0, %s155
      %s158 = sphi 0, %s157
      %s172 = sphi 0, %s158
      %s176 = sphi 0, %s176
      %s178 = sphi 0, %s176
      %s179 = sphi 0, %s178
      %s193 = sphi 0, %s179
      %s199 = sphi 0, %s201
      %s202 = sphi 0, %s199
      %s203 = sphi 0, %s202
      %s219 = sphi 0, %s203
      %s225 = sphi 0, %s227
      %s228 = sphi 0, %s225
      %s229 = sphi 0, %s228
      %s245 = sphi 0, %s229
      %s251 = sphi 0, %s253
      %s254 = sphi 0, %s251
      %s255 = sphi 0, %s254
      %s271 = sphi 0, %s255
      %s277 = sphi 0, %s279
      %s280 = sphi 0, %s277
      %s281 = sphi 0, %s280
      %s297 = sphi 0, %s281
      %s303 = sphi 0, %s305
      %s306 = sphi 0, %s303
      %s307 = sphi 0, %s306
      %s323 = sphi 0, %s307
      %s329 = sphi 0, %s331
      %s332 = sphi 0, %s329
      %s333 = sphi 0, %s332
      %s349 = sphi 0, %s333
      %s355 = sphi 0, %s357
      %s358 = sphi 0, %s355
      %s359 = sphi 0, %s358
      %s375 = sphi 0, %s359
      %s379 = sphi 0, %s379
      %s381 = sphi 0, %s379
      %s382 = sphi 0, %s381
      %s396 = sphi 0, %s382
      %s400 = sphi 0, %s400
      %s402 = sphi 0, %s400
      %s403 = sphi 0, %s402
      %s417 = sphi 0, %s403
      %s423 = sphi 0, %s425
      %s426 = sphi 0, %s423
      %s427 = sphi 0, %s426
      %s443 = sphi 0, %s427
    $region4: #{tpu_custom_call.1} parent=1 // loop_header_branch
      %28 = sbr.rel (%p26) target = $region8
    $region5: #{tpu_custom_call.1} parent=1 // loop_body
      %s30 = ssub.s32 %s25, 1
      %s31 = ssub.s32 %s25, 2
      %s38 = sadd.s32 1, %s33
      %p39 = scmp.ge.s32.totalorder %s38, 2
      %s40 = scalar_select %p39, 0, %s38
      %s41 = sadd.s32 1, %s32
      %s42 = scalar_select %p39, %s41, %s32
      %p43 = scmp.ge.s32.totalorder %s42, 2
      %s44 = scalar_select %p43, 0, %s42
      %s45 = ssub.s32 %s32, %s44
      %p46 = scmp.eq.s32.totalorder %s45, 0
      %s48 = sadd.s32 %s47, 1
      %s49 = scalar_select %p46, %s47, %s48
      %p52 = pneg %p46
      %p53 = scmp.eq.s32.totalorder %s25, 3
      %p54 = por %p52, %p53
      %p55 = scmp.ne.s32.totalorder %s47, %s50
      %p56 = scmp.eq.s32.totalorder %s25, 0
      %p57 = por %p55, %p56
      %p58 = scmp.ne.s32.totalorder %s47, %s50
      %p59 = scmp.eq.s32.totalorder %s30, 3
      %p60 = por %p58, %p59
      %p61 = scmp.ne.s32.totalorder %s50, %s51
      %p62 = scmp.eq.s32.totalorder %s30, 0
      %p63 = por %p61, %p62
      %p64 = scmp.ne.s32.totalorder %s50, %s51
      %p65 = scmp.eq.s32.totalorder %s31, 3
      %p66 = por %p64, %p65
      %p68 = scmp.ne.s32.totalorder %s51, %s67
      %p69 = scmp.eq.s32.totalorder %s31, 0
      %p70 = por %p68, %p69
      %s72 = sadd.s32 %s71, 1
      %p75 = scmp.eq.s32.totalorder %s25, 3
      %p76 = scmp.ne.s32.totalorder %s71, %s73
      %p77 = scmp.eq.s32.totalorder %s25, 0
      %p78 = por %p76, %p77
      %p79 = scmp.ne.s32.totalorder %s71, %s73
      %p80 = scmp.eq.s32.totalorder %s30, 3
      %p81 = por %p79, %p80
      %p82 = scmp.ne.s32.totalorder %s73, %s74
      %p83 = scmp.eq.s32.totalorder %s30, 0
      %p84 = por %p82, %p83
      %p85 = scmp.ne.s32.totalorder %s73, %s74
      %p86 = scmp.eq.s32.totalorder %s31, 3
      %p87 = por %p85, %p86
      %p89 = scmp.ne.s32.totalorder %s74, %s88
      %p90 = scmp.eq.s32.totalorder %s31, 0
      %p91 = por %p89, %p90
      %s93 = sadd.s32 %s92, 1
      %p96 = scmp.eq.s32.totalorder %s25, 3
      %p97 = scmp.ne.s32.totalorder %s92, %s94
      %p98 = scmp.eq.s32.totalorder %s25, 0
      %p99 = por %p97, %p98
      %p100 = scmp.ne.s32.totalorder %s92, %s94
      %p101 = scmp.eq.s32.totalorder %s30, 3
      %p102 = por %p100, %p101
      %p103 = scmp.ne.s32.totalorder %s94, %s95
      %p104 = scmp.eq.s32.totalorder %s30, 0
      %p105 = por %p103, %p104
      %p106 = scmp.ne.s32.totalorder %s94, %s95
      %p107 = scmp.eq.s32.totalorder %s31, 3
      %p108 = por %p106, %p107
      %p110 = scmp.ne.s32.totalorder %s95, %s109
      %p111 = scmp.eq.s32.totalorder %s31, 0
      %p112 = por %p110, %p111
      %s114 = sadd.s32 %s113, 1
      %p117 = scmp.eq.s32.totalorder %s25, 3
      %p118 = scmp.ne.s32.totalorder %s113, %s115
      %p119 = scmp.eq.s32.totalorder %s25, 0
      %p120 = por %p118, %p119
      %p121 = scmp.ne.s32.totalorder %s113, %s115
      %p122 = scmp.eq.s32.totalorder %s30, 3
      %p123 = por %p121, %p122
      %p124 = scmp.ne.s32.totalorder %s115, %s116
      %p125 = scmp.eq.s32.totalorder %s30, 0
      %p126 = por %p124, %p125
      %p127 = scmp.ne.s32.totalorder %s115, %s116
      %p128 = scmp.eq.s32.totalorder %s31, 3
      %p129 = por %p127, %p128
      %p131 = scmp.ne.s32.totalorder %s116, %s130
      %p132 = scmp.eq.s32.totalorder %s31, 0
      %p133 = por %p131, %p132
      %s135 = sadd.s32 %s134, 1
      %p138 = scmp.eq.s32.totalorder %s25, 3
      %p139 = scmp.ne.s32.totalorder %s134, %s136
      %p140 = scmp.eq.s32.totalorder %s25, 0
      %p141 = por %p139, %p140
      %p142 = scmp.ne.s32.totalorder %s134, %s136
      %p143 = scmp.eq.s32.totalorder %s30, 3
      %p144 = por %p142, %p143
      %p145 = scmp.ne.s32.totalorder %s136, %s137
      %p146 = scmp.eq.s32.totalorder %s30, 0
      %p147 = por %p145, %p146
      %p148 = scmp.ne.s32.totalorder %s136, %s137
      %p149 = scmp.eq.s32.totalorder %s31, 3
      %p150 = por %p148, %p149
      %p152 = scmp.ne.s32.totalorder %s137, %s151
      %p153 = scmp.eq.s32.totalorder %s31, 0
      %p154 = por %p152, %p153
      %s156 = sadd.s32 %s155, 1
      %p159 = scmp.eq.s32.totalorder %s25, 3
      %p160 = scmp.ne.s32.totalorder %s155, %s157
      %p161 = scmp.eq.s32.totalorder %s25, 0
      %p162 = por %p160, %p161
      %p163 = scmp.ne.s32.totalorder %s155, %s157
      %p164 = scmp.eq.s32.totalorder %s30, 3
      %p165 = por %p163, %p164
      %p166 = scmp.ne.s32.totalorder %s157, %s158
      %p167 = scmp.eq.s32.totalorder %s30, 0
      %p168 = por %p166, %p167
      %p169 = scmp.ne.s32.totalorder %s157, %s158
      %p170 = scmp.eq.s32.totalorder %s31, 3
      %p171 = por %p169, %p170
      %p173 = scmp.ne.s32.totalorder %s158, %s172
      %p174 = scmp.eq.s32.totalorder %s31, 0
      %p175 = por %p173, %p174
      %s177 = sadd.s32 %s176, 1
      %p180 = scmp.eq.s32.totalorder %s25, 3
      %p181 = scmp.ne.s32.totalorder %s176, %s178
      %p182 = scmp.eq.s32.totalorder %s25, 0
      %p183 = por %p181, %p182
      %p184 = scmp.ne.s32.totalorder %s176, %s178
      %p185 = scmp.eq.s32.totalorder %s30, 3
      %p186 = por %p184, %p185
      %p187 = scmp.ne.s32.totalorder %s178, %s179
      %p188 = scmp.eq.s32.totalorder %s30, 0
      %p189 = por %p187, %p188
      %p190 = scmp.ne.s32.totalorder %s178, %s179
      %p191 = scmp.eq.s32.totalorder %s31, 3
      %p192 = por %p190, %p191
      %p194 = scmp.ne.s32.totalorder %s179, %s193
      %p195 = scmp.eq.s32.totalorder %s31, 0
      %p196 = por %p194, %p195
      %s197 = ssub.s32 %s33, %s40
      %p198 = scmp.eq.s32.totalorder %s197, 0
      %s200 = sadd.s32 %s199, 1
      %s201 = scalar_select %p198, %s199, %s200
      %p204 = pneg %p198
      %p205 = scmp.eq.s32.totalorder %s25, 3
      %p206 = por %p204, %p205
      %p207 = scmp.ne.s32.totalorder %s199, %s202
      %p208 = scmp.eq.s32.totalorder %s25, 0
      %p209 = por %p207, %p208
      %p210 = scmp.ne.s32.totalorder %s199, %s202
      %p211 = scmp.eq.s32.totalorder %s30, 3
      %p212 = por %p210, %p211
      %p213 = scmp.ne.s32.totalorder %s202, %s203
      %p214 = scmp.eq.s32.totalorder %s30, 0
      %p215 = por %p213, %p214
      %p216 = scmp.ne.s32.totalorder %s202, %s203
      %p217 = scmp.eq.s32.totalorder %s31, 3
      %p218 = por %p216, %p217
      %p220 = scmp.ne.s32.totalorder %s203, %s219
      %p221 = scmp.eq.s32.totalorder %s31, 0
      %p222 = por %p220, %p221
      %s223 = ssub.s32 %s33, %s40
      %p224 = scmp.eq.s32.totalorder %s223, 0
      %s226 = sadd.s32 %s225, 1
      %s227 = scalar_select %p224, %s225, %s226
      %p230 = pneg %p224
      %p231 = scmp.eq.s32.totalorder %s25, 3
      %p232 = por %p230, %p231
      %p233 = scmp.ne.s32.totalorder %s225, %s228
      %p234 = scmp.eq.s32.totalorder %s25, 0
      %p235 = por %p233, %p234
      %p236 = scmp.ne.s32.totalorder %s225, %s228
      %p237 = scmp.eq.s32.totalorder %s30, 3
      %p238 = por %p236, %p237
      %p239 = scmp.ne.s32.totalorder %s228, %s229
      %p240 = scmp.eq.s32.totalorder %s30, 0
      %p241 = por %p239, %p240
      %p242 = scmp.ne.s32.totalorder %s228, %s229
      %p243 = scmp.eq.s32.totalorder %s31, 3
      %p244 = por %p242, %p243
      %p246 = scmp.ne.s32.totalorder %s229, %s245
      %p247 = scmp.eq.s32.totalorder %s31, 0
      %p248 = por %p246, %p247
      %s249 = ssub.s32 %s33, %s40
      %p250 = scmp.eq.s32.totalorder %s249, 0
      %s252 = sadd.s32 %s251, 1
      %s253 = scalar_select %p250, %s251, %s252
      %p256 = pneg %p250
      %p257 = scmp.eq.s32.totalorder %s25, 3
      %p258 = por %p256, %p257
      %p259 = scmp.ne.s32.totalorder %s251, %s254
      %p260 = scmp.eq.s32.totalorder %s25, 0
      %p261 = por %p259, %p260
      %p262 = scmp.ne.s32.totalorder %s251, %s254
      %p263 = scmp.eq.s32.totalorder %s30, 3
      %p264 = por %p262, %p263
      %p265 = scmp.ne.s32.totalorder %s254, %s255
      %p266 = scmp.eq.s32.totalorder %s30, 0
      %p267 = por %p265, %p266
      %p268 = scmp.ne.s32.totalorder %s254, %s255
      %p269 = scmp.eq.s32.totalorder %s31, 3
      %p270 = por %p268, %p269
      %p272 = scmp.ne.s32.totalorder %s255, %s271
      %p273 = scmp.eq.s32.totalorder %s31, 0
      %p274 = por %p272, %p273
      %s275 = ssub.s32 %s33, %s40
      %p276 = scmp.eq.s32.totalorder %s275, 0
      %s278 = sadd.s32 %s277, 1
      %s279 = scalar_select %p276, %s277, %s278
      %p282 = pneg %p276
      %p283 = scmp.eq.s32.totalorder %s25, 3
      %p284 = por %p282, %p283
      %p285 = scmp.ne.s32.totalorder %s277, %s280
      %p286 = scmp.eq.s32.totalorder %s25, 0
      %p287 = por %p285, %p286
      %p288 = scmp.ne.s32.totalorder %s277, %s280
      %p289 = scmp.eq.s32.totalorder %s30, 3
      %p290 = por %p288, %p289
      %p291 = scmp.ne.s32.totalorder %s280, %s281
      %p292 = scmp.eq.s32.totalorder %s30, 0
      %p293 = por %p291, %p292
      %p294 = scmp.ne.s32.totalorder %s280, %s281
      %p295 = scmp.eq.s32.totalorder %s31, 3
      %p296 = por %p294, %p295
      %p298 = scmp.ne.s32.totalorder %s281, %s297
      %p299 = scmp.eq.s32.totalorder %s31, 0
      %p300 = por %p298, %p299
      %s301 = ssub.s32 %s33, %s40
      %p302 = scmp.eq.s32.totalorder %s301, 0
      %s304 = sadd.s32 %s303, 1
      %s305 = scalar_select %p302, %s303, %s304
      %p308 = pneg %p302
      %p309 = scmp.eq.s32.totalorder %s25, 3
      %p310 = por %p308, %p309
      %p311 = scmp.ne.s32.totalorder %s303, %s306
      %p312 = scmp.eq.s32.totalorder %s25, 0
      %p313 = por %p311, %p312
      %p314 = scmp.ne.s32.totalorder %s303, %s306
      %p315 = scmp.eq.s32.totalorder %s30, 3
      %p316 = por %p314, %p315
      %p317 = scmp.ne.s32.totalorder %s306, %s307
      %p318 = scmp.eq.s32.totalorder %s30, 0
      %p319 = por %p317, %p318
      %p320 = scmp.ne.s32.totalorder %s306, %s307
      %p321 = scmp.eq.s32.totalorder %s31, 3
      %p322 = por %p320, %p321
      %p324 = scmp.ne.s32.totalorder %s307, %s323
      %p325 = scmp.eq.s32.totalorder %s31, 0
      %p326 = por %p324, %p325
      %s327 = ssub.s32 %s33, %s40
      %p328 = scmp.eq.s32.totalorder %s327, 0
      %s330 = sadd.s32 %s329, 1
      %s331 = scalar_select %p328, %s329, %s330
      %p334 = pneg %p328
      %p335 = scmp.eq.s32.totalorder %s25, 3
      %p336 = por %p334, %p335
      %p337 = scmp.ne.s32.totalorder %s329, %s332
      %p338 = scmp.eq.s32.totalorder %s25, 0
      %p339 = por %p337, %p338
      %p340 = scmp.ne.s32.totalorder %s329, %s332
      %p341 = scmp.eq.s32.totalorder %s30, 3
      %p342 = por %p340, %p341
      %p343 = scmp.ne.s32.totalorder %s332, %s333
      %p344 = scmp.eq.s32.totalorder %s30, 0
      %p345 = por %p343, %p344
      %p346 = scmp.ne.s32.totalorder %s332, %s333
      %p347 = scmp.eq.s32.totalorder %s31, 3
      %p348 = por %p346, %p347
      %p350 = scmp.ne.s32.totalorder %s333, %s349
      %p351 = scmp.eq.s32.totalorder %s31, 0
      %p352 = por %p350, %p351
      %s353 = ssub.s32 %s33, %s40
      %p354 = scmp.eq.s32.totalorder %s353, 0
      %s356 = sadd.s32 %s355, 1
      %s357 = scalar_select %p354, %s355, %s356
      %p360 = pneg %p354
      %p361 = scmp.eq.s32.totalorder %s25, 3
      %p362 = por %p360, %p361
      %p363 = scmp.ne.s32.totalorder %s355, %s358
      %p364 = scmp.eq.s32.totalorder %s25, 0
      %p365 = por %p363, %p364
      %p366 = scmp.ne.s32.totalorder %s355, %s358
      %p367 = scmp.eq.s32.totalorder %s30, 3
      %p368 = por %p366, %p367
      %p369 = scmp.ne.s32.totalorder %s358, %s359
      %p370 = scmp.eq.s32.totalorder %s30, 0
      %p371 = por %p369, %p370
      %p372 = scmp.ne.s32.totalorder %s358, %s359
      %p373 = scmp.eq.s32.totalorder %s31, 3
      %p374 = por %p372, %p373
      %p376 = scmp.ne.s32.totalorder %s359, %s375
      %p377 = scmp.eq.s32.totalorder %s31, 0
      %p378 = por %p376, %p377
      %s380 = sadd.s32 %s379, 1
      %p383 = scmp.eq.s32.totalorder %s25, 3
      %p384 = scmp.ne.s32.totalorder %s379, %s381
      %p385 = scmp.eq.s32.totalorder %s25, 0
      %p386 = por %p384, %p385
      %p387 = scmp.ne.s32.totalorder %s379, %s381
      %p388 = scmp.eq.s32.totalorder %s30, 3
      %p389 = por %p387, %p388
      %p390 = scmp.ne.s32.totalorder %s381, %s382
      %p391 = scmp.eq.s32.totalorder %s30, 0
      %p392 = por %p390, %p391
      %p393 = scmp.ne.s32.totalorder %s381, %s382
      %p394 = scmp.eq.s32.totalorder %s31, 3
      %p395 = por %p393, %p394
      %p397 = scmp.ne.s32.totalorder %s382, %s396
      %p398 = scmp.eq.s32.totalorder %s31, 0
      %p399 = por %p397, %p398
      %s401 = sadd.s32 %s400, 1
      %p404 = scmp.eq.s32.totalorder %s25, 3
      %p405 = scmp.ne.s32.totalorder %s400, %s402
      %p406 = scmp.eq.s32.totalorder %s25, 0
      %p407 = por %p405, %p406
      %p408 = scmp.ne.s32.totalorder %s400, %s402
      %p409 = scmp.eq.s32.totalorder %s30, 3
      %p410 = por %p408, %p409
      %p411 = scmp.ne.s32.totalorder %s402, %s403
      %p412 = scmp.eq.s32.totalorder %s30, 0
      %p413 = por %p411, %p412
      %p414 = scmp.ne.s32.totalorder %s402, %s403
      %p415 = scmp.eq.s32.totalorder %s31, 3
      %p416 = por %p414, %p415
      %p418 = scmp.ne.s32.totalorder %s403, %s417
      %p419 = scmp.eq.s32.totalorder %s31, 0
      %p420 = por %p418, %p419
      %s421 = ssub.s32 %s32, %s44
      %p422 = scmp.eq.s32.totalorder %s421, 0
      %s424 = sadd.s32 %s423, 1
      %s425 = scalar_select %p422, %s423, %s424
      %p428 = pneg %p422
      %p429 = scmp.eq.s32.totalorder %s25, 3
      %p430 = por %p428, %p429
      %p431 = scmp.ne.s32.totalorder %s423, %s426
      %p432 = scmp.eq.s32.totalorder %s25, 0
      %p433 = por %p431, %p432
      %p434 = scmp.ne.s32.totalorder %s423, %s426
      %p435 = scmp.eq.s32.totalorder %s30, 3
      %p436 = por %p434, %p435
      %p437 = scmp.ne.s32.totalorder %s426, %s427
      %p438 = scmp.eq.s32.totalorder %s30, 0
      %p439 = por %p437, %p438
      %p440 = scmp.ne.s32.totalorder %s426, %s427
      %p441 = scmp.eq.s32.totalorder %s31, 3
      %p442 = por %p440, %p441
      %p444 = scmp.ne.s32.totalorder %s427, %s443
      %p445 = scmp.eq.s32.totalorder %s31, 0
      %p446 = por %p444, %p445
      %p447 = scmp.le.s32.totalorder 1, %s25
      %p448 = scmp.lt.s32.totalorder %s25, 5
      %p449 = pnand %p447, %p448
      %p450 = pneg %p449
      // Predicated region
      $region9: #{tpu_custom_call.1} parent=5 // pred_check
        _
      $region10: #{tpu_custom_call.1} parent=5 // pred_check_branch
        %452 = sbr.rel (%p449) target = $region12
      $region11: #{tpu_custom_call.1} parent=5 // pred_region
        %s453 = ssub.s32 %s25, 1
        // Predicated region
        $region13: #{tpu_custom_call.1} parent=11 // pred_check
          %p454 = pneg %p84
        $region14: #{tpu_custom_call.1} parent=11 // pred_check_branch
          %456 = sbr.rel (%p454) target = $region16
        $region15: #{tpu_custom_call.1} parent=11 // pred_region
          _
        $region16: #{tpu_custom_call.1} parent=11 // pred_fallthru
          _
        // Predicated region
        $region17: #{tpu_custom_call.1} parent=11 // pred_check
          %p457 = pneg %p105
        $region18: #{tpu_custom_call.1} parent=11 // pred_check_branch
          %459 = sbr.rel (%p457) target = $region20
        $region19: #{tpu_custom_call.1} parent=11 // pred_region
          _
        $region20: #{tpu_custom_call.1} parent=11 // pred_fallthru
          _
        // Predicated region
        $region21: #{tpu_custom_call.1} parent=11 // pred_check
          %p460 = pneg %p126
        $region22: #{tpu_custom_call.1} parent=11 // pred_check_branch
          %462 = sbr.rel (%p460) target = $region24
        $region23: #{tpu_custom_call.1} parent=11 // pred_region
          _
        $region24: #{tpu_custom_call.1} parent=11 // pred_fallthru
          _
        // Predicated region
        $region25: #{tpu_custom_call.1} parent=11 // pred_check
          %p463 = pneg %p147
        $region26: #{tpu_custom_call.1} parent=11 // pred_check_branch
          %465 = sbr.rel (%p463) target = $region28
        $region27: #{tpu_custom_call.1} parent=11 // pred_region
          _
        $region28: #{tpu_custom_call.1} parent=11 // pred_fallthru
          _
        // Predicated region
        $region29: #{tpu_custom_call.1} parent=11 // pred_check
          %p466 = pneg %p168
        $region30: #{tpu_custom_call.1} parent=11 // pred_check_branch
          %468 = sbr.rel (%p466) target = $region32
        $region31: #{tpu_custom_call.1} parent=11 // pred_region
          _
        $region32: #{tpu_custom_call.1} parent=11 // pred_fallthru
          _
        // Predicated region
        $region33: #{tpu_custom_call.1} parent=11 // pred_check
          %p469 = pneg %p189
        $region34: #{tpu_custom_call.1} parent=11 // pred_check_branch
          %471 = sbr.rel (%p469) target = $region36
        $region35: #{tpu_custom_call.1} parent=11 // pred_region
          _
        $region36: #{tpu_custom_call.1} parent=11 // pred_fallthru
          _
        // Predicated region
        $region37: #{tpu_custom_call.1} parent=11 // pred_check
          %p472 = pneg %p392
        $region38: #{tpu_custom_call.1} parent=11 // pred_check_branch
          %474 = sbr.rel (%p472) target = $region40
        $region39: #{tpu_custom_call.1} parent=11 // pred_region
          _
        $region40: #{tpu_custom_call.1} parent=11 // pred_fallthru
          _
        // Predicated region
        $region41: #{tpu_custom_call.1} parent=11 // pred_check
          %p475 = pneg %p413
        $region42: #{tpu_custom_call.1} parent=11 // pred_check_branch
          %477 = sbr.rel (%p475) target = $region44
        $region43: #{tpu_custom_call.1} parent=11 // pred_region
          _
        $region44: #{tpu_custom_call.1} parent=11 // pred_fallthru
          _
      $region12: #{tpu_custom_call.1} parent=5 // pred_fallthru
        _
      %p478 = scmp.lt.s32.totalorder %s25, 4
      // Predicated region
      $region45: #{tpu_custom_call.1} parent=5 // pred_check
        %p479 = pneg %p478
      $region46: #{tpu_custom_call.1} parent=5 // pred_check_branch
        %481 = sbr.rel (%p479) target = $region48
      $region47: #{tpu_custom_call.1} parent=5 // pred_region
        // Predicated region
        $region49: #{tpu_custom_call.1} parent=47 // pred_check
          %p482 = pneg %p57
        $region50: #{tpu_custom_call.1} parent=47 // pred_check_branch
          %484 = sbr.rel (%p482) target = $region52
        $region51: #{tpu_custom_call.1} parent=47 // pred_region
          %p485 = scmp.lt.s32.totalorder %s32, 1
          %s486 = scalar_select %p485, %s32, 1
          %s487 = smul.addr %s486, 8
          %s488 = scalar_lea.vmem %s0, %s487
        $region52: #{tpu_custom_call.1} parent=47 // pred_fallthru
          _
        // Predicated region
        $region53: #{tpu_custom_call.1} parent=47 // pred_check
          %p489 = pneg %p209
        $region54: #{tpu_custom_call.1} parent=47 // pred_check_branch
          %491 = sbr.rel (%p489) target = $region56
        $region55: #{tpu_custom_call.1} parent=47 // pred_region
          %p492 = scmp.lt.s32.totalorder %s33, 1
          %s493 = scalar_select %p492, %s33, 1
          %s494 = scalar_lea.vmem %s7, %s493
        $region56: #{tpu_custom_call.1} parent=47 // pred_fallthru
          _
        // Predicated region
        $region57: #{tpu_custom_call.1} parent=47 // pred_check
          %p495 = pneg %p235
        $region58: #{tpu_custom_call.1} parent=47 // pred_check_branch
          %497 = sbr.rel (%p495) target = $region60
        $region59: #{tpu_custom_call.1} parent=47 // pred_region
          %p498 = scmp.lt.s32.totalorder %s33, 1
          %s499 = scalar_select %p498, %s33, 1
          %s500 = scalar_lea.vmem %s8, %s499
        $region60: #{tpu_custom_call.1} parent=47 // pred_fallthru
          _
        // Predicated region
        $region61: #{tpu_custom_call.1} parent=47 // pred_check
          %p501 = pneg %p261
        $region62: #{tpu_custom_call.1} parent=47 // pred_check_branch
          %503 = sbr.rel (%p501) target = $region64
        $region63: #{tpu_custom_call.1} parent=47 // pred_region
          %p504 = scmp.lt.s32.totalorder %s33, 1
          %s505 = scalar_select %p504, %s33, 1
          %s506 = scalar_lea.vmem %s9, %s505
        $region64: #{tpu_custom_call.1} parent=47 // pred_fallthru
          _
        // Predicated region
        $region65: #{tpu_custom_call.1} parent=47 // pred_check
          %p507 = pneg %p287
        $region66: #{tpu_custom_call.1} parent=47 // pred_check_branch
          %509 = sbr.rel (%p507) target = $region68
        $region67: #{tpu_custom_call.1} parent=47 // pred_region
          %p510 = scmp.lt.s32.totalorder %s33, 1
          %s511 = scalar_select %p510, %s33, 1
          %s512 = smul.addr %s511, 24
          %s513 = smul.addr %s512, 4
          %s514 = scalar_lea.vmem %s10, %s513
        $region68: #{tpu_custom_call.1} parent=47 // pred_fallthru
          _
        // Predicated region
        $region69: #{tpu_custom_call.1} parent=47 // pred_check
          %p515 = pneg %p313
        $region70: #{tpu_custom_call.1} parent=47 // pred_check_branch
          %517 = sbr.rel (%p515) target = $region72
        $region71: #{tpu_custom_call.1} parent=47 // pred_region
          %p518 = scmp.lt.s32.totalorder %s33, 1
          %s519 = scalar_select %p518, %s33, 1
          %s520 = smul.addr %s519, 8
          %s521 = smul.addr %s520, 4
          %s522 = scalar_lea.vmem %s11, %s521
        $region72: #{tpu_custom_call.1} parent=47 // pred_fallthru
          _
        // Predicated region
        $region73: #{tpu_custom_call.1} parent=47 // pred_check
          %p523 = pneg %p339
        $region74: #{tpu_custom_call.1} parent=47 // pred_check_branch
          %525 = sbr.rel (%p523) target = $region76
        $region75: #{tpu_custom_call.1} parent=47 // pred_region
          %p526 = scmp.lt.s32.totalorder %s33, 1
          %s527 = scalar_select %p526, %s33, 1
          %s528 = smul.addr %s527, 16
          %s529 = smul.addr %s528, 4
          %s530 = scalar_lea.vmem %s12, %s529
        $region76: #{tpu_custom_call.1} parent=47 // pred_fallthru
          _
        // Predicated region
        $region77: #{tpu_custom_call.1} parent=47 // pred_check
          %p531 = pneg %p365
        $region78: #{tpu_custom_call.1} parent=47 // pred_check_branch
          %533 = sbr.rel (%p531) target = $region80
        $region79: #{tpu_custom_call.1} parent=47 // pred_region
          %p534 = scmp.lt.s32.totalorder %s33, 1
          %s535 = scalar_select %p534, %s33, 1
          %s536 = smul.addr %s535, 32
          %s537 = smul.addr %s536, 4
          %s538 = scalar_lea.vmem %s13, %s537
        $region80: #{tpu_custom_call.1} parent=47 // pred_fallthru
          _
      $region48: #{tpu_custom_call.1} parent=5 // pred_fallthru
        _
      %p539 = scmp.le.s32.totalorder 1, %s25
      %p540 = scmp.lt.s32.totalorder %s25, 5
      %p541 = pnand %p539, %p540
      %p542 = pneg %p541
      // Predicated region
      $region81: #{tpu_custom_call.1} parent=5 // pred_check
        _
      $region82: #{tpu_custom_call.1} parent=5 // pred_check_branch
        %544 = sbr.rel (%p541) target = $region84
      $region83: #{tpu_custom_call.1} parent=5 // pred_region
        %s545 = ssub.s32 %s25, 1
        %p546 = scmp.lt.s32.totalorder %s34, 1
        %s547 = scalar_select %p546, %s34, 1
        %s548 = smul.addr %s547, 8
        %s549 = scalar_lea.vmem %s0, %s548
        %p550 = pneg %p63
        %p551 = pneg %p60
        %p552 = pneg %p84
        %p553 = pneg %p81
        %p554 = pneg %p105
        %p555 = pneg %p102
        %p556 = pneg %p126
        %p557 = pneg %p123
        %p558 = pneg %p147
        %p559 = pneg %p144
        %p560 = pneg %p168
        %p561 = pneg %p165
        %p562 = pneg %p189
        %p563 = pneg %p186
        %p564 = scmp.lt.s32.totalorder %s35, 1
        %s565 = scalar_select %p564, %s35, 1
        %s566 = scalar_lea.vmem %s7, %s565
        %p567 = pneg %p215
        %p568 = pneg %p212
        %p569 = scmp.lt.s32.totalorder %s35, 1
        %s570 = scalar_select %p569, %s35, 1
        %s571 = scalar_lea.vmem %s8, %s570
        %p572 = pneg %p241
        %p573 = pneg %p238
        %p574 = scmp.lt.s32.totalorder %s35, 1
        %s575 = scalar_select %p574, %s35, 1
        %s576 = scalar_lea.vmem %s9, %s575
        %p577 = pneg %p267
        %p578 = pneg %p264
        %p579 = scmp.lt.s32.totalorder %s35, 1
        %s580 = scalar_select %p579, %s35, 1
        %s581 = smul.addr %s580, 24
        %s582 = smul.addr %s581, 4
        %s583 = scalar_lea.vmem %s10, %s582
        %p584 = pneg %p293
        %p585 = pneg %p290
        %p586 = scmp.lt.s32.totalorder %s35, 1
        %s587 = scalar_select %p586, %s35, 1
        %s588 = smul.addr %s587, 8
        %s589 = smul.addr %s588, 4
        %s590 = scalar_lea.vmem %s11, %s589
        %p591 = pneg %p319
        %p592 = pneg %p316
        %p593 = scmp.lt.s32.totalorder %s35, 1
        %s594 = scalar_select %p593, %s35, 1
        %s595 = smul.addr %s594, 16
        %s596 = smul.addr %s595, 4
        %s597 = scalar_lea.vmem %s12, %s596
        %p598 = pneg %p345
        %p599 = pneg %p342
        %p600 = scmp.lt.s32.totalorder %s35, 1
        %s601 = scalar_select %p600, %s35, 1
        %s602 = smul.addr %s601, 32
        %s603 = smul.addr %s602, 4
        %s604 = scalar_lea.vmem %s13, %s603
        %p605 = pneg %p371
        %p606 = pneg %p368
        %p607 = pneg %p392
        %p608 = pneg %p389
        %p609 = pneg %p413
        %p610 = pneg %p410
        %p611 = pneg %p439
        %p612 = pneg %p436
        %s613 = sand.u32 %s426, 1
        %s614 = scalar_lea.sflag [#allocation5], %s613
        %s615 = sand.u32 %s426, 1
        %s616 = smul.addr %s615, 8
        %s617 = scalar_lea.vmem [#allocation4], %s616
        %p618 = scmp.lt.s32.totalorder %s34, 1
        %s619 = scalar_select %p618, %s34, 1
        %s620 = smul.addr %s619, 8
        %s621 = scalar_lea.vmem %s0, %s620
        %p622 = scmp.lt.s32.totalorder %s35, 1
        %s623 = scalar_select %p622, %s35, 1
        %s624 = scalar_lea.vmem %s7, %s623
        %p625 = scmp.lt.s32.totalorder %s35, 1
        %s626 = scalar_select %p625, %s35, 1
        %s627 = scalar_lea.vmem %s8, %s626
        %p628 = scmp.lt.s32.totalorder %s35, 1
        %s629 = scalar_select %p628, %s35, 1
        %s630 = scalar_lea.vmem %s9, %s629
        %p631 = scmp.lt.s32.totalorder %s35, 1
        %s632 = scalar_select %p631, %s35, 1
        %s633 = smul.addr %s632, 24
        %s634 = smul.addr %s633, 4
        %s635 = scalar_lea.vmem %s10, %s634
        %p636 = scmp.lt.s32.totalorder %s35, 1
        %s637 = scalar_select %p636, %s35, 1
        %s638 = smul.addr %s637, 8
        %s639 = smul.addr %s638, 4
        %s640 = scalar_lea.vmem %s11, %s639
        %p641 = scmp.lt.s32.totalorder %s35, 1
        %s642 = scalar_select %p641, %s35, 1
        %s643 = smul.addr %s642, 16
        %s644 = smul.addr %s643, 4
        %s645 = scalar_lea.vmem %s12, %s644
        %p646 = scmp.lt.s32.totalorder %s35, 1
        %s647 = scalar_select %p646, %s35, 1
        %s648 = smul.addr %s647, 32
        %s649 = smul.addr %s648, 4
        %s650 = scalar_lea.vmem %s13, %s649
        %p652 = scmp.eq.s32.totalorder %s35, 0
        // Predicated region
        $region85: #{tpu_custom_call.1} parent=83 // pred_check
          %p653 = pneg %p652
        $region86: #{tpu_custom_call.1} parent=83 // pred_check_branch
          %655 = sbr.rel (%p653) target = $region88
        $region87: #{tpu_custom_call.1} parent=83 // pred_region
          %v656 = vld [vmem:[%s621] sm:$0xff]
          %v657 = vpack.c.bf16 %v656, %v656
          %v658 = vld [vmem:[%s1] sm:$0xf]
          %v659 = vld [vmem:[%s1 + $0x4] sm:$0xf]
          %v660 = vld [vmem:[%s1 + $0x8] sm:$0xf]
          %v661 = vld [vmem:[%s1 + $0xc] sm:$0xf]
          %v662 = vld [vmem:[%s2] sm:$0x1]
          %v664 = vlaneseq
          %v665 = vshrl.u32 %v664, 7
          %v666 = vsub.s32 0, %v665
          %v667 = vrot.slane %v662, %v666
          %v673 = vunpack.c.l.b16 %v658
          %v674 = vunpack.c.l.b16 %v659
          %v675 = vunpack.c.l.b16 %v660
          %v676 = vunpack.c.l.b16 %v661
          %v677 = vpack.c.b16 %v674, %v673
          %v678 = vpack.c.b16 %v676, %v675
          %vm681 = vcmask 261120
          %v683 = vsel %vm681, %v657, 0
          %685 = vmatprep.subr.bf16.mxu0 0
          %686 = vmatpush1.bf16.msra.mxu0 0
          %687 = vmatprep.subr.bf16.mxu0 0
          %688 = vmatpush1.bf16.msra.mxu0 0
          %689 = vmatprep.subr.bf16.mxu0 0
          %690 = vmatpush1.bf16.msra.mxu0 0
          %691 = vmatprep.subr.bf16.mxu0 0
          %692 = vmatpush1.bf16.msra.mxu0 0
          %693 = vmatprep.subr.bf16.mxu0 0
          %694 = vmatpush1.bf16.msra.mxu0 0
          %695 = vmatprep.subr.bf16.mxu0 0
          %696 = vmatpush1.bf16.msra.mxu0 0
          %697 = vmatprep.subr.bf16.mxu0 0
          %698 = vmatpush1.bf16.msra.mxu0 %v678
          %699 = vmatprep.subr.bf16.mxu0 0
          %700 = vmatpush1.bf16.msra.mxu0 %v677
          %701 = vmatprep.subr.bf16.mxu0 0
          %702 = vmatpush2.bf16.msra.mxu0 0
          %703 = vmatprep.subr.bf16.mxu0 0
          %704 = vmatpush2.bf16.msra.mxu0 0
          %705 = vmatprep.subr.bf16.mxu0 0
          %706 = vmatpush2.bf16.msra.mxu0 0
          %707 = vmatprep.subr.bf16.mxu0 0
          %708 = vmatpush2.bf16.msra.mxu0 0
          %709 = vmatprep.subr.bf16.mxu0 0
          %710 = vmatpush2.bf16.msra.mxu0 0
          %711 = vmatprep.subr.bf16.mxu0 0
          %712 = vmatpush2.bf16.msra.mxu0 0
          %713 = vmatprep.subr.bf16.mxu0 0
          %714 = vmatpush2.bf16.msra.mxu0 0
          %715 = vmatprep.subr.bf16.mxu0 0
          %716 = vmatpush2.bf16.msra.mxu0 0
          %717 = vmatprep.mubr.bf16.mxu0 0
          %718 = vmatmul.mubr.bf16.gmra.mxu0 %v683
          %v719 = vpop.f32.mrf.mxu0
          %v720 = vadd.f32 %v667, %v719
          %v721 = vpop.f32.mrf.mxu0
          %v722 = vpop.f32.mrf.mxu0
          %v723 = vpop.f32.mrf.mxu0
          %724 = vdwg.mxu0
          %vm725 = vcmask 523264
          %726 = vst.msk [vmem:[#allocation2] sm:$0xff] %vm725, %v720
        $region88: #{tpu_custom_call.1} parent=83 // pred_fallthru
          _
        %v727 = vld [vmem:[#allocation2] sm:$0xff]
        %v728 = vld [vmem:[%s3] sm:$0xff]
        %v729 = vld [vmem:[%s4] sm:$0xff]
        %v730 = vld [vmem:[%s624] sm:$0x1]
        %v731 = vld [vmem:[%s627] sm:$0x1]
        %v732 = vld [vmem:[%s630] sm:$0x1]
        %v733 = vmul.f32 %v727, %v727
        %vm734 = vcmask 523264
        %v735 = vsel %vm734, %v733, 0.0
        %736 = vadd.xlane.f32.xlu0 %v735
        %v737 = vpop.xlane.xlu0 %736
        %v738 = vrcp.pop 64.0
        %v739 = vmul.f32 %v737, %v738
        %v740 = vadd.f32 %v739, 1e-05
        %v741 = vrsqrt.pop %v740
        %v742 = vmul.f32 %v727, %v741
        %v744 = vlaneseq
        %v745 = vshrl.u32 %v744, 7
        %v746 = vsub.s32 0, %v745
        %v747 = vrot.slane %v730, %v746
        %v749 = vmul.f32 %v742, %v747
        %v750 = vpack.c.bf16 %v749, %v749
        %v751 = vld [vmem:[%s635] sm:$0xff]
        %v752 = vld [vmem:[%s635 + $0x8] sm:$0xf]
        %v753 = vld [vmem:[%s635 + $0xc] sm:$0xff]
        %v754 = vld [vmem:[%s635 + $0x14] sm:$0xf]
        %v755 = vld [vmem:[%s635 + $0x18] sm:$0xff]
        %v756 = vld [vmem:[%s635 + $0x20] sm:$0xf]
        %v757 = vld [vmem:[%s635 + $0x24] sm:$0xff]
        %v758 = vld [vmem:[%s635 + $0x2c] sm:$0xf]
        %v759 = vld [vmem:[%s635 + $0x30] sm:$0xff]
        %v760 = vld [vmem:[%s635 + $0x38] sm:$0xf]
        %v761 = vld [vmem:[%s635 + $0x3c] sm:$0xff]
        %v762 = vld [vmem:[%s635 + $0x44] sm:$0xf]
        %v763 = vld [vmem:[%s635 + $0x48] sm:$0xff]
        %v764 = vld [vmem:[%s635 + $0x50] sm:$0xf]
        %v765 = vld [vmem:[%s635 + $0x54] sm:$0xff]
        %v766 = vld [vmem:[%s635 + $0x5c] sm:$0xf]
        %v783 = vunpack.c.l.b16 %v751
        %v784 = vunpack.c.h.b16 %v751
        %v785 = vunpack.c.l.b16 %v752
        %v786 = vunpack.c.l.b16 %v753
        %v787 = vunpack.c.h.b16 %v753
        %v788 = vunpack.c.l.b16 %v754
        %v789 = vunpack.c.l.b16 %v755
        %v790 = vunpack.c.h.b16 %v755
        %v791 = vunpack.c.l.b16 %v756
        %v792 = vunpack.c.l.b16 %v757
        %v793 = vunpack.c.h.b16 %v757
        %v794 = vunpack.c.l.b16 %v758
        %v795 = vunpack.c.l.b16 %v759
        %v796 = vunpack.c.h.b16 %v759
        %v797 = vunpack.c.l.b16 %v760
        %v798 = vunpack.c.l.b16 %v761
        %v799 = vunpack.c.h.b16 %v761
        %v800 = vunpack.c.l.b16 %v762
        %v801 = vunpack.c.l.b16 %v763
        %v802 = vunpack.c.h.b16 %v763
        %v803 = vunpack.c.l.b16 %v764
        %v804 = vunpack.c.l.b16 %v765
        %v805 = vunpack.c.h.b16 %v765
        %v806 = vunpack.c.l.b16 %v766
        %v807 = vpack.c.b16 %v786, %v783
        %v808 = vpack.c.b16 %v787, %v784
        %v809 = vpack.c.b16 %v788, %v785
        %v810 = vpack.c.b16 %v792, %v789
        %v811 = vpack.c.b16 %v793, %v790
        %v812 = vpack.c.b16 %v794, %v791
        %v813 = vpack.c.b16 %v798, %v795
        %v814 = vpack.c.b16 %v799, %v796
        %v815 = vpack.c.b16 %v800, %v797
        %v816 = vpack.c.b16 %v804, %v801
        %v817 = vpack.c.b16 %v805, %v802
        %v818 = vpack.c.b16 %v806, %v803
        %v832 = vsel %vm734, %v750, 0
        %834 = vmatprep.subr.bf16.mxu0 0
        %835 = vmatpush1.bf16.msra.mxu0 0
        %836 = vmatprep.subr.bf16.mxu0 0
        %837 = vmatpush1.bf16.msra.mxu0 0
        %838 = vmatprep.subr.bf16.mxu0 0
        %839 = vmatpush1.bf16.msra.mxu0 0
        %840 = vmatprep.subr.bf16.mxu0 0
        %841 = vmatpush1.bf16.msra.mxu0 0
        %842 = vmatprep.subr.bf16.mxu0 %v817
        %843 = vmatpush1.bf16.msra.mxu0 %v816
        %844 = vmatprep.subr.bf16.mxu0 %v814
        %845 = vmatpush1.bf16.msra.mxu0 %v813
        %846 = vmatprep.subr.bf16.mxu0 %v811
        %847 = vmatpush1.bf16.msra.mxu0 %v810
        %848 = vmatprep.subr.bf16.mxu0 %v808
        %849 = vmatpush1.bf16.msra.mxu0 %v807
        %850 = vmatprep.subr.bf16.mxu0 0
        %851 = vmatpush2.bf16.msra.mxu0 0
        %852 = vmatprep.subr.bf16.mxu0 0
        %853 = vmatpush2.bf16.msra.mxu0 0
        %854 = vmatprep.subr.bf16.mxu0 0
        %855 = vmatpush2.bf16.msra.mxu0 0
        %856 = vmatprep.subr.bf16.mxu0 0
        %857 = vmatpush2.bf16.msra.mxu0 0
        %858 = vmatprep.subr.bf16.mxu0 0
        %859 = vmatpush2.bf16.msra.mxu0 0
        %860 = vmatprep.subr.bf16.mxu0 0
        %861 = vmatpush2.bf16.msra.mxu0 0
        %862 = vmatprep.subr.bf16.mxu0 0
        %863 = vmatpush2.bf16.msra.mxu0 0
        %864 = vmatprep.subr.bf16.mxu0 0
        %865 = vmatpush2.bf16.msra.mxu0 0
        %866 = vmatprep.mubr.bf16.mxu0 0
        %867 = vmatmul.mubr.bf16.gmra.mxu0 %v832
        %v868 = vpop.f32.mrf.mxu0
        %v869 = vadd.f32 0.0, %v868
        %v870 = vpop.f32.mrf.mxu0
        %v871 = vadd.f32 0.0, %v870
        %v872 = vpop.f32.mrf.mxu0
        %v873 = vpop.f32.mrf.mxu0
        %874 = vdwg.mxu0
        %875 = vmatprep.subr.bf16.mxu0 0
        %876 = vmatpush1.bf16.msra.mxu0 0
        %877 = vmatprep.subr.bf16.mxu0 0
        %878 = vmatpush1.bf16.msra.mxu0 0
        %879 = vmatprep.subr.bf16.mxu0 0
        %880 = vmatpush1.bf16.msra.mxu0 0
        %881 = vmatprep.subr.bf16.mxu0 0
        %882 = vmatpush1.bf16.msra.mxu0 0
        %883 = vmatprep.subr.bf16.mxu0 0
        %884 = vmatpush1.bf16.msra.mxu0 %v818
        %885 = vmatprep.subr.bf16.mxu0 0
        %886 = vmatpush1.bf16.msra.mxu0 %v815
        %887 = vmatprep.subr.bf16.mxu0 0
        %888 = vmatpush1.bf16.msra.mxu0 %v812
        %889 = vmatprep.subr.bf16.mxu0 0
        %890 = vmatpush1.bf16.msra.mxu0 %v809
        %891 = vmatprep.subr.bf16.mxu0 0
        %892 = vmatpush2.bf16.msra.mxu0 0
        %893 = vmatprep.subr.bf16.mxu0 0
        %894 = vmatpush2.bf16.msra.mxu0 0
        %895 = vmatprep.subr.bf16.mxu0 0
        %896 = vmatpush2.bf16.msra.mxu0 0
        %897 = vmatprep.subr.bf16.mxu0 0
        %898 = vmatpush2.bf16.msra.mxu0 0
        %899 = vmatprep.subr.bf16.mxu0 0
        %900 = vmatpush2.bf16.msra.mxu0 0
        %901 = vmatprep.subr.bf16.mxu0 0
        %902 = vmatpush2.bf16.msra.mxu0 0
        %903 = vmatprep.subr.bf16.mxu0 0
        %904 = vmatpush2.bf16.msra.mxu0 0
        %905 = vmatprep.subr.bf16.mxu0 0
        %906 = vmatpush2.bf16.msra.mxu0 0
        %907 = vmatprep.mubr.bf16.mxu0 0
        %908 = vmatmul.mubr.bf16.gmra.mxu0 %v832
        %v909 = vpop.f32.mrf.mxu0
        %v910 = vadd.f32 0.0, %v909
        %v911 = vpop.f32.mrf.mxu0
        %v912 = vpop.f32.mrf.mxu0
        %v913 = vpop.f32.mrf.mxu0
        %914 = vdwg.mxu0
        %v915 = vpack.c.bf16 %v871, %v871
        %v916 = vmul.f32 %v869, %v869
        %v917 = vld [vmem:[%s5] sm:$0xff]
        %v918 = vld [vmem:[%s5 + $0x8] sm:$0xff]
        %v919 = vld [vmem:[%s5 + $0x10] sm:$0xff]
        %v920 = vld [vmem:[%s5 + $0x18] sm:$0xff]
        %v921 = vld [vmem:[%s5 + $0x20] sm:$0xff]
        %v922 = vld [vmem:[%s5 + $0x28] sm:$0xff]
        %v923 = vld [vmem:[%s5 + $0x30] sm:$0xff]
        %v924 = vld [vmem:[%s5 + $0x38] sm:$0xff]
        %v926 = vsel %vm734, %v916, 0
        %928 = vmatprep.subr.mxu0 0.0
        %929 = vmatpush1.msra.mxu0 0.0
        %930 = vmatprep.subr.mxu0 0.0
        %931 = vmatpush1.msra.mxu0 0.0
        %932 = vmatprep.subr.mxu0 0.0
        %933 = vmatpush1.msra.mxu0 0.0
        %934 = vmatprep.subr.mxu0 0.0
        %935 = vmatpush1.msra.mxu0 0.0
        %936 = vmatprep.subr.mxu0 0.0
        %937 = vmatpush1.msra.mxu0 0.0
        %938 = vmatprep.subr.mxu0 0.0
        %939 = vmatpush1.msra.mxu0 0.0
        %940 = vmatprep.subr.mxu0 0.0
        %941 = vmatpush1.msra.mxu0 0.0
        %942 = vmatprep.subr.mxu0 0.0
        %943 = vmatpush1.msra.mxu0 0.0
        %944 = vmatprep.subr.mxu0 0.0
        %945 = vmatpush1.msra.mxu0 %v924
        %946 = vmatprep.subr.mxu0 0.0
        %947 = vmatpush1.msra.mxu0 %v923
        %948 = vmatprep.subr.mxu0 0.0
        %949 = vmatpush1.msra.mxu0 %v922
        %950 = vmatprep.subr.mxu0 0.0
        %951 = vmatpush1.msra.mxu0 %v921
        %952 = vmatprep.subr.mxu0 0.0
        %953 = vmatpush1.msra.mxu0 %v920
        %954 = vmatprep.subr.mxu0 0.0
        %955 = vmatpush1.msra.mxu0 %v919
        %956 = vmatprep.subr.mxu0 0.0
        %957 = vmatpush1.msra.mxu0 %v918
        %958 = vmatprep.subr.mxu0 0.0
        %959 = vmatpush1.msra.mxu0 %v917
        %960 = vmatprep.subr.mxu0 0.0
        %961 = vmatpush2.msra.mxu0 0.0
        %962 = vmatprep.subr.mxu0 0.0
        %963 = vmatpush2.msra.mxu0 0.0
        %964 = vmatprep.subr.mxu0 0.0
        %965 = vmatpush2.msra.mxu0 0.0
        %966 = vmatprep.subr.mxu0 0.0
        %967 = vmatpush2.msra.mxu0 0.0
        %968 = vmatprep.subr.mxu0 0.0
        %969 = vmatpush2.msra.mxu0 0.0
        %970 = vmatprep.subr.mxu0 0.0
        %971 = vmatpush2.msra.mxu0 0.0
        %972 = vmatprep.subr.mxu0 0.0
        %973 = vmatpush2.msra.mxu0 0.0
        %974 = vmatprep.subr.mxu0 0.0
        %975 = vmatpush2.msra.mxu0 0.0
        %976 = vmatprep.subr.mxu0 0.0
        %977 = vmatpush2.msra.mxu0 0.0
        %978 = vmatprep.subr.mxu0 0.0
        %979 = vmatpush2.msra.mxu0 0.0
        %980 = vmatprep.subr.mxu0 0.0
        %981 = vmatpush2.msra.mxu0 0.0
        %982 = vmatprep.subr.mxu0 0.0
        %983 = vmatpush2.msra.mxu0 0.0
        %984 = vmatprep.subr.mxu0 0.0
        %985 = vmatpush2.msra.mxu0 0.0
        %986 = vmatprep.subr.mxu0 0.0
        %987 = vmatpush2.msra.mxu0 0.0
        %988 = vmatprep.subr.mxu0 0.0
        %989 = vmatpush2.msra.mxu0 0.0
        %990 = vmatprep.subr.mxu0 0.0
        %991 = vmatpush2.msra.mxu0 0.0
        %992 = vmatprep.mubr.f32.mxu0 0.0
        %993 = vmatmul.mubr.f32.gmra.mxu0 %v926
        %v994 = vpop.f32.mrf.mxu0
        %v995 = vadd.f32 0.0, %v994
        %v996 = vpop.f32.mrf.mxu0
        %997 = vdwg.mxu0
        %v998 = vld [vmem:[%s6] sm:$0xf]
        %vm999 = vcmask 31744
        %v1001 = vsel %vm999, %v995, 0
        %vm1003 = vcmask 1043456
        %v1005 = vsel %vm1003, %v998, 0
        %1007 = vmatprep.subr.mxu0 0.0
        %1008 = vmatpush1.msra.mxu0 0.0
        %1009 = vmatprep.subr.mxu0 0.0
        %1010 = vmatpush1.msra.mxu0 0.0
        %1011 = vmatprep.subr.mxu0 0.0
        %1012 = vmatpush1.msra.mxu0 0.0
        %1013 = vmatprep.subr.mxu0 0.0
        %1014 = vmatpush1.msra.mxu0 0.0
        %1015 = vmatprep.subr.mxu0 0.0
        %1016 = vmatpush1.msra.mxu0 0.0
        %1017 = vmatprep.subr.mxu0 0.0
        %1018 = vmatpush1.msra.mxu0 0.0
        %1019 = vmatprep.subr.mxu0 0.0
        %1020 = vmatpush1.msra.mxu0 0.0
        %1021 = vmatprep.subr.mxu0 0.0
        %1022 = vmatpush1.msra.mxu0 0.0
        %1023 = vmatprep.subr.mxu0 0.0
        %1024 = vmatpush1.msra.mxu0 0.0
        %1025 = vmatprep.subr.mxu0 0.0
        %1026 = vmatpush1.msra.mxu0 0.0
        %1027 = vmatprep.subr.mxu0 0.0
        %1028 = vmatpush1.msra.mxu0 0.0
        %1029 = vmatprep.subr.mxu0 0.0
        %1030 = vmatpush1.msra.mxu0 0.0
        %1031 = vmatprep.subr.mxu0 0.0
        %1032 = vmatpush1.msra.mxu0 0.0
        %1033 = vmatprep.subr.mxu0 0.0
        %1034 = vmatpush1.msra.mxu0 0.0
        %1035 = vmatprep.subr.mxu0 0.0
        %1036 = vmatpush1.msra.mxu0 0.0
        %1037 = vmatprep.subr.mxu0 0.0
        %1038 = vmatpush1.msra.mxu0 %v1005
        %1039 = vmatprep.subr.mxu0 0.0
        %1040 = vmatpush2.msra.mxu0 0.0
        %1041 = vmatprep.subr.mxu0 0.0
        %1042 = vmatpush2.msra.mxu0 0.0
        %1043 = vmatprep.subr.mxu0 0.0
        %1044 = vmatpush2.msra.mxu0 0.0
        %1045 = vmatprep.subr.mxu0 0.0
        %1046 = vmatpush2.msra.mxu0 0.0
        %1047 = vmatprep.subr.mxu0 0.0
        %1048 = vmatpush2.msra.mxu0 0.0
        %1049 = vmatprep.subr.mxu0 0.0
        %1050 = vmatpush2.msra.mxu0 0.0
        %1051 = vmatprep.subr.mxu0 0.0
        %1052 = vmatpush2.msra.mxu0 0.0
        %1053 = vmatprep.subr.mxu0 0.0
        %1054 = vmatpush2.msra.mxu0 0.0
        %1055 = vmatprep.subr.mxu0 0.0
        %1056 = vmatpush2.msra.mxu0 0.0
        %1057 = vmatprep.subr.mxu0 0.0
        %1058 = vmatpush2.msra.mxu0 0.0
        %1059 = vmatprep.subr.mxu0 0.0
        %1060 = vmatpush2.msra.mxu0 0.0
        %1061 = vmatprep.subr.mxu0 0.0
        %1062 = vmatpush2.msra.mxu0 0.0
        %1063 = vmatprep.subr.mxu0 0.0
        %1064 = vmatpush2.msra.mxu0 0.0
        %1065 = vmatprep.subr.mxu0 0.0
        %1066 = vmatpush2.msra.mxu0 0.0
        %1067 = vmatprep.subr.mxu0 0.0
        %1068 = vmatpush2.msra.mxu0 0.0
        %1069 = vmatprep.subr.mxu0 0.0
        %1070 = vmatpush2.msra.mxu0 0.0
        %1071 = vmatprep.mubr.f32.mxu0 0.0
        %1072 = vmatmul.mubr.f32.gmra.mxu0 %v1001
        %v1073 = vpop.f32.mrf.mxu0
        %v1074 = vadd.f32 0.0, %v1073
        %v1075 = vpop.f32.mrf.mxu0
        %1076 = vdwg.mxu0
        %1077 = vrot.lane.b32.xlu0 %v916, 64
        %v1078 = vpop.permute.xlu0 %1077
        %v1079 = vsel %vm734, %v1078, 0
        %1081 = vmatprep.subr.mxu0 0.0
        %1082 = vmatpush1.msra.mxu0 0.0
        %1083 = vmatprep.subr.mxu0 0.0
        %1084 = vmatpush1.msra.mxu0 0.0
        %1085 = vmatprep.subr.mxu0 0.0
        %1086 = vmatpush1.msra.mxu0 0.0
        %1087 = vmatprep.subr.mxu0 0.0
        %1088 = vmatpush1.msra.mxu0 0.0
        %1089 = vmatprep.subr.mxu0 0.0
        %1090 = vmatpush1.msra.mxu0 0.0
        %1091 = vmatprep.subr.mxu0 0.0
        %1092 = vmatpush1.msra.mxu0 0.0
        %1093 = vmatprep.subr.mxu0 0.0
        %1094 = vmatpush1.msra.mxu0 0.0
        %1095 = vmatprep.subr.mxu0 0.0
        %1096 = vmatpush1.msra.mxu0 0.0
        %1097 = vmatprep.subr.mxu0 0.0
        %1098 = vmatpush1.msra.mxu0 %v924
        %1099 = vmatprep.subr.mxu0 0.0
        %1100 = vmatpush1.msra.mxu0 %v923
        %1101 = vmatprep.subr.mxu0 0.0
        %1102 = vmatpush1.msra.mxu0 %v922
        %1103 = vmatprep.subr.mxu0 0.0
        %1104 = vmatpush1.msra.mxu0 %v921
        %1105 = vmatprep.subr.mxu0 0.0
        %1106 = vmatpush1.msra.mxu0 %v920
        %1107 = vmatprep.subr.mxu0 0.0
        %1108 = vmatpush1.msra.mxu0 %v919
        %1109 = vmatprep.subr.mxu0 0.0
        %1110 = vmatpush1.msra.mxu0 %v918
        %1111 = vmatprep.subr.mxu0 0.0
        %1112 = vmatpush1.msra.mxu0 %v917
        %1113 = vmatprep.subr.mxu0 0.0
        %1114 = vmatpush2.msra.mxu0 0.0
        %1115 = vmatprep.subr.mxu0 0.0
        %1116 = vmatpush2.msra.mxu0 0.0
        %1117 = vmatprep.subr.mxu0 0.0
        %1118 = vmatpush2.msra.mxu0 0.0
        %1119 = vmatprep.subr.mxu0 0.0
        %1120 = vmatpush2.msra.mxu0 0.0
        %1121 = vmatprep.subr.mxu0 0.0
        %1122 = vmatpush2.msra.mxu0 0.0
        %1123 = vmatprep.subr.mxu0 0.0
        %1124 = vmatpush2.msra.mxu0 0.0
        %1125 = vmatprep.subr.mxu0 0.0
        %1126 = vmatpush2.msra.mxu0 0.0
        %1127 = vmatprep.subr.mxu0 0.0
        %1128 = vmatpush2.msra.mxu0 0.0
        %1129 = vmatprep.subr.mxu0 0.0
        %1130 = vmatpush2.msra.mxu0 0.0
        %1131 = vmatprep.subr.mxu0 0.0
        %1132 = vmatpush2.msra.mxu0 0.0
        %1133 = vmatprep.subr.mxu0 0.0
        %1134 = vmatpush2.msra.mxu0 0.0
        %1135 = vmatprep.subr.mxu0 0.0
        %1136 = vmatpush2.msra.mxu0 0.0
        %1137 = vmatprep.subr.mxu0 0.0
        %1138 = vmatpush2.msra.mxu0 0.0
        %1139 = vmatprep.subr.mxu0 0.0
        %1140 = vmatpush2.msra.mxu0 0.0
        %1141 = vmatprep.subr.mxu0 0.0
        %1142 = vmatpush2.msra.mxu0 0.0
        %1143 = vmatprep.subr.mxu0 0.0
        %1144 = vmatpush2.msra.mxu0 0.0
        %1145 = vmatprep.mubr.f32.mxu0 0.0
        %1146 = vmatmul.mubr.f32.gmra.mxu0 %v1079
        %v1147 = vpop.f32.mrf.mxu0
        %v1148 = vadd.f32 0.0, %v1147
        %v1149 = vpop.f32.mrf.mxu0
        %1150 = vdwg.mxu0
        %v1152 = vsel %vm999, %v1148, 0
        %1154 = vmatprep.subr.mxu0 0.0
        %1155 = vmatpush1.msra.mxu0 0.0
        %1156 = vmatprep.subr.mxu0 0.0
        %1157 = vmatpush1.msra.mxu0 0.0
        %1158 = vmatprep.subr.mxu0 0.0
        %1159 = vmatpush1.msra.mxu0 0.0
        %1160 = vmatprep.subr.mxu0 0.0
        %1161 = vmatpush1.msra.mxu0 0.0
        %1162 = vmatprep.subr.mxu0 0.0
        %1163 = vmatpush1.msra.mxu0 0.0
        %1164 = vmatprep.subr.mxu0 0.0
        %1165 = vmatpush1.msra.mxu0 0.0
        %1166 = vmatprep.subr.mxu0 0.0
        %1167 = vmatpush1.msra.mxu0 0.0
        %1168 = vmatprep.subr.mxu0 0.0
        %1169 = vmatpush1.msra.mxu0 0.0
        %1170 = vmatprep.subr.mxu0 0.0
        %1171 = vmatpush1.msra.mxu0 0.0
        %1172 = vmatprep.subr.mxu0 0.0
        %1173 = vmatpush1.msra.mxu0 0.0
        %1174 = vmatprep.subr.mxu0 0.0
        %1175 = vmatpush1.msra.mxu0 0.0
        %1176 = vmatprep.subr.mxu0 0.0
        %1177 = vmatpush1.msra.mxu0 0.0
        %1178 = vmatprep.subr.mxu0 0.0
        %1179 = vmatpush1.msra.mxu0 0.0
        %1180 = vmatprep.subr.mxu0 0.0
        %1181 = vmatpush1.msra.mxu0 0.0
        %1182 = vmatprep.subr.mxu0 0.0
        %1183 = vmatpush1.msra.mxu0 0.0
        %1184 = vmatprep.subr.mxu0 0.0
        %1185 = vmatpush1.msra.mxu0 %v1005
        %1186 = vmatprep.subr.mxu0 0.0
        %1187 = vmatpush2.msra.mxu0 0.0
        %1188 = vmatprep.subr.mxu0 0.0
        %1189 = vmatpush2.msra.mxu0 0.0
        %1190 = vmatprep.subr.mxu0 0.0
        %1191 = vmatpush2.msra.mxu0 0.0
        %1192 = vmatprep.subr.mxu0 0.0
        %1193 = vmatpush2.msra.mxu0 0.0
        %1194 = vmatprep.subr.mxu0 0.0
        %1195 = vmatpush2.msra.mxu0 0.0
        %1196 = vmatprep.subr.mxu0 0.0
        %1197 = vmatpush2.msra.mxu0 0.0
        %1198 = vmatprep.subr.mxu0 0.0
        %1199 = vmatpush2.msra.mxu0 0.0
        %1200 = vmatprep.subr.mxu0 0.0
        %1201 = vmatpush2.msra.mxu0 0.0
        %1202 = vmatprep.subr.mxu0 0.0
        %1203 = vmatpush2.msra.mxu0 0.0
        %1204 = vmatprep.subr.mxu0 0.0
        %1205 = vmatpush2.msra.mxu0 0.0
        %1206 = vmatprep.subr.mxu0 0.0
        %1207 = vmatpush2.msra.mxu0 0.0
        %1208 = vmatprep.subr.mxu0 0.0
        %1209 = vmatpush2.msra.mxu0 0.0
        %1210 = vmatprep.subr.mxu0 0.0
        %1211 = vmatpush2.msra.mxu0 0.0
        %1212 = vmatprep.subr.mxu0 0.0
        %1213 = vmatpush2.msra.mxu0 0.0
        %1214 = vmatprep.subr.mxu0 0.0
        %1215 = vmatpush2.msra.mxu0 0.0
        %1216 = vmatprep.subr.mxu0 0.0
        %1217 = vmatpush2.msra.mxu0 0.0
        %1218 = vmatprep.mubr.f32.mxu0 0.0
        %1219 = vmatmul.mubr.f32.gmra.mxu0 %v1152
        %v1220 = vpop.f32.mrf.mxu0
        %v1221 = vadd.f32 0.0, %v1220
        %v1222 = vpop.f32.mrf.mxu0
        %1223 = vdwg.mxu0
        %v1224 = vmul.f32 %v1074, 0.0625
        %v1225 = vadd.f32 %v1224, 1e-05
        %v1226 = vrsqrt.pop %v1225
        %v1227 = vmul.f32 %v1221, 0.0625
        %v1228 = vadd.f32 %v1227, 1e-05
        %v1229 = vrsqrt.pop %v1228
        %v1230 = vmul.f32 %v869, %v1226
        %v1232 = vlaneseq
        %v1233 = vshrl.u32 %v1232, 7
        %v1234 = vsub.s32 0, %v1233
        %v1235 = vrot.slane %v731, %v1234
        %v1237 = vmul.f32 %v1230, %v1235
        %v1238 = vmul.f32 %v1237, %v728
        %1240 = vrot.lane.b32.xlu0 %v1226, 64
        %v1241 = vpop.permute.xlu0 %1240
        %v1243 = vmul.f32 %v871, %v1241
        %v1245 = vlaneseq
        %v1246 = vshrl.u32 %v1245, 7
        %v1247 = vsub.s32 0, %v1246
        %v1248 = vrot.slane %v732, %v1247
        %1250 = vrot.lane.b32.xlu0 %v1248, 64
        %v1251 = vpop.permute.xlu0 %1250
        %v1253 = vmul.f32 %v1243, %v1251
        %1255 = vrot.lane.b32.xlu0 %v729, 64
        %v1256 = vpop.permute.xlu0 %1255
        %v1258 = vmul.f32 %v1253, %v1256
        %1260 = vrot.lane.b32.xlu0 %v1258, 64
        %v1261 = vpop.permute.xlu0 %1260
        %v1263 = vadd.f32 %v1238, %v1261
        %v1264 = vpack.c.bf16 %v1263, %v1263
        %1266 = vrot.lane.b32.xlu0 %v1229, 64
        %v1267 = vpop.permute.xlu0 %1266
        %v1269 = vmul.f32 %v869, %v1267
        %1270 = vrot.lane.b32.xlu0 %v1235, 64
        %v1271 = vpop.permute.xlu0 %1270
        %v1273 = vmul.f32 %v1269, %v1271
        %1275 = vrot.lane.b32.xlu0 %v728, 64
        %v1276 = vpop.permute.xlu0 %1275
        %v1278 = vmul.f32 %v1273, %v1276
        %v1279 = vmul.f32 %v910, %v1229
        %v1280 = vmul.f32 %v1279, %v1248
        %v1281 = vmul.f32 %v1280, %v729
        %1283 = vrot.lane.b32.xlu0 %v1281, 64
        %v1284 = vpop.permute.xlu0 %1283
        %v1286 = vadd.f32 %v1278, %v1284
        %v1287 = vpack.c.bf16 %v1286, %v1286
        %1289 = vrot.lane.b32.xlu0 %v1287, 64
        %v1290 = vpop.permute.xlu0 %1289
        %vm1291 = vcmask 130048
        %v1293 = vsel %vm1291, %v1264, 0
        %v1296 = vsel %vm1291, %v1290, 0
        %1298 = vmatprep.subr.bf16.mxu0 0
        %1299 = vmatpush1.bf16.xpose.msra.mxu0 0
        %1300 = vmatprep.subr.bf16.mxu0 0
        %1301 = vmatpush1.bf16.xpose.msra.mxu0 0
        %1302 = vmatprep.subr.bf16.mxu0 0
        %1303 = vmatpush1.bf16.xpose.msra.mxu0 0
        %1304 = vmatprep.subr.bf16.mxu0 0
        %1305 = vmatpush1.bf16.xpose.msra.mxu0 0
        %1306 = vmatprep.subr.bf16.mxu0 0
        %1307 = vmatpush1.bf16.xpose.msra.mxu0 0
        %1308 = vmatprep.subr.bf16.mxu0 0
        %1309 = vmatpush1.bf16.xpose.msra.mxu0 0
        %1310 = vmatprep.subr.bf16.mxu0 0
        %1311 = vmatpush1.bf16.xpose.msra.mxu0 0
        %1312 = vmatprep.subr.bf16.mxu0 0
        %1313 = vmatpush1.bf16.xpose.msra.mxu0 %v1296
        %1314 = vmatprep.subr.bf16.mxu0 0
        %1315 = vmatpush2.bf16.xpose.msra.mxu0 0
        %1316 = vmatprep.subr.bf16.mxu0 0
        %1317 = vmatpush2.bf16.xpose.msra.mxu0 0
        %1318 = vmatprep.subr.bf16.mxu0 0
        %1319 = vmatpush2.bf16.xpose.msra.mxu0 0
        %1320 = vmatprep.subr.bf16.mxu0 0
        %1321 = vmatpush2.bf16.xpose.msra.mxu0 0
        %1322 = vmatprep.subr.bf16.mxu0 0
        %1323 = vmatpush2.bf16.xpose.msra.mxu0 0
        %1324 = vmatprep.subr.bf16.mxu0 0
        %1325 = vmatpush2.bf16.xpose.msra.mxu0 0
        %1326 = vmatprep.subr.bf16.mxu0 0
        %1327 = vmatpush2.bf16.xpose.msra.mxu0 0
        %1328 = vmatprep.subr.bf16.mxu0 0
        %1329 = vmatpush2.bf16.xpose.msra.mxu0 0
        %1330 = vmatprep.mubr.bf16.mxu0 0
        %1331 = vmatmul.mubr.bf16.gmra.mxu0 %v1293
        %v1332 = vpop.f32.mrf.mxu0
        %v1333 = vadd.f32 0.0, %v1332
        %v1334 = vpop.f32.mrf.mxu0
        %v1335 = vpop.f32.mrf.mxu0
        %v1336 = vpop.f32.mrf.mxu0
        %1337 = vdwg.mxu0
        %v1338 = vmul.f32 %v1333, 0.25
        %vm1339 = vcmask 64512
        %v1340 = vsel %vm1339, %v1338, -inf
        %1341 = vmax.xlane.f32.xlu0 %v1340
        %v1342 = vpop.xlane.xlu0 %1341
        %v1343 = vsub.f32 %v1338, %v1342
        %v1344 = vmul.f32 %v1343, 1.442695
        %v1345 = vpow.pop %v1344
        %v1346 = vsel %vm1339, %v1345, 0.0
        %1347 = vadd.xlane.f32.xlu0 %v1346
        %v1348 = vpop.xlane.xlu0 %1347
        %v1349 = vrcp.pop %v1348
        %v1350 = vmul.f32 %v1345, %v1349
        %v1351 = vpack.c.bf16 %v1350, %v1350
        %v1353 = vsel %vm1339, %v1351, 0
        %v1356 = vsel %vm1003, %v915, 0
        %1358 = vmatprep.subr.bf16.mxu0 0
        %1359 = vmatpush1.bf16.msra.mxu0 0
        %1360 = vmatprep.subr.bf16.mxu0 0
        %1361 = vmatpush1.bf16.msra.mxu0 0
        %1362 = vmatprep.subr.bf16.mxu0 0
        %1363 = vmatpush1.bf16.msra.mxu0 0
        %1364 = vmatprep.subr.bf16.mxu0 0
        %1365 = vmatpush1.bf16.msra.mxu0 0
        %1366 = vmatprep.subr.bf16.mxu0 0
        %1367 = vmatpush1.bf16.msra.mxu0 0
        %1368 = vmatprep.subr.bf16.mxu0 0
        %1369 = vmatpush1.bf16.msra.mxu0 0
        %1370 = vmatprep.subr.bf16.mxu0 0
        %1371 = vmatpush1.bf16.msra.mxu0 0
        %1372 = vmatprep.subr.bf16.mxu0 0
        %1373 = vmatpush1.bf16.msra.mxu0 %v1356
        %1374 = vmatprep.subr.bf16.mxu0 0
        %1375 = vmatpush2.bf16.msra.mxu0 0
        %1376 = vmatprep.subr.bf16.mxu0 0
        %1377 = vmatpush2.bf16.msra.mxu0 0
        %1378 = vmatprep.subr.bf16.mxu0 0
        %1379 = vmatpush2.bf16.msra.mxu0 0
        %1380 = vmatprep.subr.bf16.mxu0 0
        %1381 = vmatpush2.bf16.msra.mxu0 0
        %1382 = vmatprep.subr.bf16.mxu0 0
        %1383 = vmatpush2.bf16.msra.mxu0 0
        %1384 = vmatprep.subr.bf16.mxu0 0
        %1385 = vmatpush2.bf16.msra.mxu0 0
        %1386 = vmatprep.subr.bf16.mxu0 0
        %1387 = vmatpush2.bf16.msra.mxu0 0
        %1388 = vmatprep.subr.bf16.mxu0 0
        %1389 = vmatpush2.bf16.msra.mxu0 0
        %1390 = vmatprep.mubr.bf16.mxu0 0
        %1391 = vmatmul.mubr.bf16.gmra.mxu0 %v1353
        %v1392 = vpop.f32.mrf.mxu0
        %v1393 = vadd.f32 0.0, %v1392
        %v1394 = vpop.f32.mrf.mxu0
        %v1395 = vpop.f32.mrf.mxu0
        %v1396 = vpop.f32.mrf.mxu0
        %1397 = vdwg.mxu0
        %v1398 = vpack.c.bf16 %v1393, %v1393
        %vm1399 = vcmask 125952
        %1400 = vst.msk [vmem:[#allocation3] sm:$0xf] %vm1399, %v1398
        %1402 = vrot.lane.b32.xlu0 %v1264, 112
        %v1403 = vpop.permute.xlu0 %1402
        %1404 = vrot.lane.b32.xlu0 %v1287, 48
        %v1405 = vpop.permute.xlu0 %1404
        %v1407 = vsel %vm1291, %v1403, 0
        %v1410 = vsel %vm1291, %v1405, 0
        %1412 = vmatprep.subr.bf16.mxu0 0
        %1413 = vmatpush1.bf16.xpose.msra.mxu0 0
        %1414 = vmatprep.subr.bf16.mxu0 0
        %1415 = vmatpush1.bf16.xpose.msra.mxu0 0
        %1416 = vmatprep.subr.bf16.mxu0 0
        %1417 = vmatpush1.bf16.xpose.msra.mxu0 0
        %1418 = vmatprep.subr.bf16.mxu0 0
        %1419 = vmatpush1.bf16.xpose.msra.mxu0 0
        %1420 = vmatprep.subr.bf16.mxu0 0
        %1421 = vmatpush1.bf16.xpose.msra.mxu0 0
        %1422 = vmatprep.subr.bf16.mxu0 0
        %1423 = vmatpush1.bf16.xpose.msra.mxu0 0
        %1424 = vmatprep.subr.bf16.mxu0 0
        %1425 = vmatpush1.bf16.xpose.msra.mxu0 0
        %1426 = vmatprep.subr.bf16.mxu0 0
        %1427 = vmatpush1.bf16.xpose.msra.mxu0 %v1410
        %1428 = vmatprep.subr.bf16.mxu0 0
        %1429 = vmatpush2.bf16.xpose.msra.mxu0 0
        %1430 = vmatprep.subr.bf16.mxu0 0
        %1431 = vmatpush2.bf16.xpose.msra.mxu0 0
        %1432 = vmatprep.subr.bf16.mxu0 0
        %1433 = vmatpush2.bf16.xpose.msra.mxu0 0
        %1434 = vmatprep.subr.bf16.mxu0 0
        %1435 = vmatpush2.bf16.xpose.msra.mxu0 0
        %1436 = vmatprep.subr.bf16.mxu0 0
        %1437 = vmatpush2.bf16.xpose.msra.mxu0 0
        %1438 = vmatprep.subr.bf16.mxu0 0
        %1439 = vmatpush2.bf16.xpose.msra.mxu0 0
        %1440 = vmatprep.subr.bf16.mxu0 0
        %1441 = vmatpush2.bf16.xpose.msra.mxu0 0
        %1442 = vmatprep.subr.bf16.mxu0 0
        %1443 = vmatpush2.bf16.xpose.msra.mxu0 0
        %1444 = vmatprep.mubr.bf16.mxu0 0
        %1445 = vmatmul.mubr.bf16.gmra.mxu0 %v1407
        %v1446 = vpop.f32.mrf.mxu0
        %v1447 = vadd.f32 0.0, %v1446
        %v1448 = vpop.f32.mrf.mxu0
        %v1449 = vpop.f32.mrf.mxu0
        %v1450 = vpop.f32.mrf.mxu0
        %1451 = vdwg.mxu0
        %v1452 = vmul.f32 %v1447, 0.25
        %v1453 = vsel %vm1339, %v1452, -inf
        %1454 = vmax.xlane.f32.xlu0 %v1453
        %v1455 = vpop.xlane.xlu0 %1454
        %v1456 = vsub.f32 %v1452, %v1455
        %v1457 = vmul.f32 %v1456, 1.442695
        %v1458 = vpow.pop %v1457
        %v1459 = vsel %vm1339, %v1458, 0.0
        %1460 = vadd.xlane.f32.xlu0 %v1459
        %v1461 = vpop.xlane.xlu0 %1460
        %v1462 = vrcp.pop %v1461
        %v1463 = vmul.f32 %v1458, %v1462
        %v1464 = vpack.c.bf16 %v1463, %v1463
        %1466 = vrot.lane.b32.xlu0 %v915, 112
        %v1467 = vpop.permute.xlu0 %1466
        %v1469 = vsel %vm1339, %v1464, 0
        %v1472 = vsel %vm1003, %v1467, 0
        %1474 = vmatprep.subr.bf16.mxu0 0
        %1475 = vmatpush1.bf16.msra.mxu0 0
        %1476 = vmatprep.subr.bf16.mxu0 0
        %1477 = vmatpush1.bf16.msra.mxu0 0
        %1478 = vmatprep.subr.bf16.mxu0 0
        %1479 = vmatpush1.bf16.msra.mxu0 0
        %1480 = vmatprep.subr.bf16.mxu0 0
        %1481 = vmatpush1.bf16.msra.mxu0 0
        %1482 = vmatprep.subr.bf16.mxu0 0
        %1483 = vmatpush1.bf16.msra.mxu0 0
        %1484 = vmatprep.subr.bf16.mxu0 0
        %1485 = vmatpush1.bf16.msra.mxu0 0
        %1486 = vmatprep.subr.bf16.mxu0 0
        %1487 = vmatpush1.bf16.msra.mxu0 0
        %1488 = vmatprep.subr.bf16.mxu0 0
        %1489 = vmatpush1.bf16.msra.mxu0 %v1472
        %1490 = vmatprep.subr.bf16.mxu0 0
        %1491 = vmatpush2.bf16.msra.mxu0 0
        %1492 = vmatprep.subr.bf16.mxu0 0
        %1493 = vmatpush2.bf16.msra.mxu0 0
        %1494 = vmatprep.subr.bf16.mxu0 0
        %1495 = vmatpush2.bf16.msra.mxu0 0
        %1496 = vmatprep.subr.bf16.mxu0 0
        %1497 = vmatpush2.bf16.msra.mxu0 0
        %1498 = vmatprep.subr.bf16.mxu0 0
        %1499 = vmatpush2.bf16.msra.mxu0 0
        %1500 = vmatprep.subr.bf16.mxu0 0
        %1501 = vmatpush2.bf16.msra.mxu0 0
        %1502 = vmatprep.subr.bf16.mxu0 0
        %1503 = vmatpush2.bf16.msra.mxu0 0
        %1504 = vmatprep.subr.bf16.mxu0 0
        %1505 = vmatpush2.bf16.msra.mxu0 0
        %1506 = vmatprep.mubr.bf16.mxu0 0
        %1507 = vmatmul.mubr.bf16.gmra.mxu0 %v1469
        %v1508 = vpop.f32.mrf.mxu0
        %v1509 = vadd.f32 0.0, %v1508
        %v1510 = vpop.f32.mrf.mxu0
        %v1511 = vpop.f32.mrf.mxu0
        %v1512 = vpop.f32.mrf.mxu0
        %1513 = vdwg.mxu0
        %v1514 = vpack.c.bf16 %v1509, %v1509
        %v1516 = vunpack.c.l.b16 %v1514
        %v1517 = vpack.c.b16 %v1516, %v1516
        %1518 = vrot.lane.b32.xlu0 %v1517, 16
        %v1519 = vpop.permute.xlu0 %1518
        %vm1521 = vcmask 257152
        %1522 = vst.msk [vmem:[#allocation3] sm:$0xf] %vm1521, %v1519
        %1523 = vrot.lane.b32.xlu0 %v1264, 96
        %v1524 = vpop.permute.xlu0 %1523
        %1525 = vrot.lane.b32.xlu0 %v1287, 32
        %v1526 = vpop.permute.xlu0 %1525
        %v1528 = vsel %vm1291, %v1524, 0
        %v1531 = vsel %vm1291, %v1526, 0
        %1533 = vmatprep.subr.bf16.mxu0 0
        %1534 = vmatpush1.bf16.xpose.msra.mxu0 0
        %1535 = vmatprep.subr.bf16.mxu0 0
        %1536 = vmatpush1.bf16.xpose.msra.mxu0 0
        %1537 = vmatprep.subr.bf16.mxu0 0
        %1538 = vmatpush1.bf16.xpose.msra.mxu0 0
        %1539 = vmatprep.subr.bf16.mxu0 0
        %1540 = vmatpush1.bf16.xpose.msra.mxu0 0
        %1541 = vmatprep.subr.bf16.mxu0 0
        %1542 = vmatpush1.bf16.xpose.msra.mxu0 0
        %1543 = vmatprep.subr.bf16.mxu0 0
        %1544 = vmatpush1.bf16.xpose.msra.mxu0 0
        %1545 = vmatprep.subr.bf16.mxu0 0
        %1546 = vmatpush1.bf16.xpose.msra.mxu0 0
        %1547 = vmatprep.subr.bf16.mxu0 0
        %1548 = vmatpush1.bf16.xpose.msra.mxu0 %v1531
        %1549 = vmatprep.subr.bf16.mxu0 0
        %1550 = vmatpush2.bf16.xpose.msra.mxu0 0
        %1551 = vmatprep.subr.bf16.mxu0 0
        %1552 = vmatpush2.bf16.xpose.msra.mxu0 0
        %1553 = vmatprep.subr.bf16.mxu0 0
        %1554 = vmatpush2.bf16.xpose.msra.mxu0 0
        %1555 = vmatprep.subr.bf16.mxu0 0
        %1556 = vmatpush2.bf16.xpose.msra.mxu0 0
        %1557 = vmatprep.subr.bf16.mxu0 0
        %1558 = vmatpush2.bf16.xpose.msra.mxu0 0
        %1559 = vmatprep.subr.bf16.mxu0 0
        %1560 = vmatpush2.bf16.xpose.msra.mxu0 0
        %1561 = vmatprep.subr.bf16.mxu0 0
        %1562 = vmatpush2.bf16.xpose.msra.mxu0 0
        %1563 = vmatprep.subr.bf16.mxu0 0
        %1564 = vmatpush2.bf16.xpose.msra.mxu0 0
        %1565 = vmatprep.mubr.bf16.mxu0 0
        %1566 = vmatmul.mubr.bf16.gmra.mxu0 %v1528
        %v1567 = vpop.f32.mrf.mxu0
        %v1568 = vadd.f32 0.0, %v1567
        %v1569 = vpop.f32.mrf.mxu0
        %v1570 = vpop.f32.mrf.mxu0
        %v1571 = vpop.f32.mrf.mxu0
        %1572 = vdwg.mxu0
        %v1573 = vmul.f32 %v1568, 0.25
        %v1574 = vsel %vm1339, %v1573, -inf
        %1575 = vmax.xlane.f32.xlu0 %v1574
        %v1576 = vpop.xlane.xlu0 %1575
        %v1577 = vsub.f32 %v1573, %v1576
        %v1578 = vmul.f32 %v1577, 1.442695
        %v1579 = vpow.pop %v1578
        %v1580 = vsel %vm1339, %v1579, 0.0
        %1581 = vadd.xlane.f32.xlu0 %v1580
        %v1582 = vpop.xlane.xlu0 %1581
        %v1583 = vrcp.pop %v1582
        %v1584 = vmul.f32 %v1579, %v1583
        %v1585 = vpack.c.bf16 %v1584, %v1584
        %1586 = vrot.lane.b32.xlu0 %v915, 96
        %v1587 = vpop.permute.xlu0 %1586
        %v1589 = vsel %vm1339, %v1585, 0
        %v1592 = vsel %vm1003, %v1587, 0
        %1594 = vmatprep.subr.bf16.mxu0 0
        %1595 = vmatpush1.bf16.msra.mxu0 0
        %1596 = vmatprep.subr.bf16.mxu0 0
        %1597 = vmatpush1.bf16.msra.mxu0 0
        %1598 = vmatprep.subr.bf16.mxu0 0
        %1599 = vmatpush1.bf16.msra.mxu0 0
        %1600 = vmatprep.subr.bf16.mxu0 0
        %1601 = vmatpush1.bf16.msra.mxu0 0
        %1602 = vmatprep.subr.bf16.mxu0 0
        %1603 = vmatpush1.bf16.msra.mxu0 0
        %1604 = vmatprep.subr.bf16.mxu0 0
        %1605 = vmatpush1.bf16.msra.mxu0 0
        %1606 = vmatprep.subr.bf16.mxu0 0
        %1607 = vmatpush1.bf16.msra.mxu0 0
        %1608 = vmatprep.subr.bf16.mxu0 0
        %1609 = vmatpush1.bf16.msra.mxu0 %v1592
        %1610 = vmatprep.subr.bf16.mxu0 0
        %1611 = vmatpush2.bf16.msra.mxu0 0
        %1612 = vmatprep.subr.bf16.mxu0 0
        %1613 = vmatpush2.bf16.msra.mxu0 0
        %1614 = vmatprep.subr.bf16.mxu0 0
        %1615 = vmatpush2.bf16.msra.mxu0 0
        %1616 = vmatprep.subr.bf16.mxu0 0
        %1617 = vmatpush2.bf16.msra.mxu0 0
        %1618 = vmatprep.subr.bf16.mxu0 0
        %1619 = vmatpush2.bf16.msra.mxu0 0
        %1620 = vmatprep.subr.bf16.mxu0 0
        %1621 = vmatpush2.bf16.msra.mxu0 0
        %1622 = vmatprep.subr.bf16.mxu0 0
        %1623 = vmatpush2.bf16.msra.mxu0 0
        %1624 = vmatprep.subr.bf16.mxu0 0
        %1625 = vmatpush2.bf16.msra.mxu0 0
        %1626 = vmatprep.mubr.bf16.mxu0 0
        %1627 = vmatmul.mubr.bf16.gmra.mxu0 %v1589
        %v1628 = vpop.f32.mrf.mxu0
        %v1629 = vadd.f32 0.0, %v1628
        %v1630 = vpop.f32.mrf.mxu0
        %v1631 = vpop.f32.mrf.mxu0
        %v1632 = vpop.f32.mrf.mxu0
        %1633 = vdwg.mxu0
        %v1634 = vpack.c.bf16 %v1629, %v1629
        %v1636 = vunpack.c.l.b16 %v1634
        %v1637 = vpack.c.b16 %v1636, %v1636
        %1638 = vrot.lane.b32.xlu0 %v1637, 32
        %v1639 = vpop.permute.xlu0 %1638
        %vm1641 = vcmask 388352
        %1642 = vst.msk [vmem:[#allocation3] sm:$0xf] %vm1641, %v1639
        %1643 = vrot.lane.b32.xlu0 %v1264, 80
        %v1644 = vpop.permute.xlu0 %1643
        %1645 = vrot.lane.b32.xlu0 %v1287, 16
        %v1646 = vpop.permute.xlu0 %1645
        %v1648 = vsel %vm1291, %v1644, 0
        %v1651 = vsel %vm1291, %v1646, 0
        %1653 = vmatprep.subr.bf16.mxu0 0
        %1654 = vmatpush1.bf16.xpose.msra.mxu0 0
        %1655 = vmatprep.subr.bf16.mxu0 0
        %1656 = vmatpush1.bf16.xpose.msra.mxu0 0
        %1657 = vmatprep.subr.bf16.mxu0 0
        %1658 = vmatpush1.bf16.xpose.msra.mxu0 0
        %1659 = vmatprep.subr.bf16.mxu0 0
        %1660 = vmatpush1.bf16.xpose.msra.mxu0 0
        %1661 = vmatprep.subr.bf16.mxu0 0
        %1662 = vmatpush1.bf16.xpose.msra.mxu0 0
        %1663 = vmatprep.subr.bf16.mxu0 0
        %1664 = vmatpush1.bf16.xpose.msra.mxu0 0
        %1665 = vmatprep.subr.bf16.mxu0 0
        %1666 = vmatpush1.bf16.xpose.msra.mxu0 0
        %1667 = vmatprep.subr.bf16.mxu0 0
        %1668 = vmatpush1.bf16.xpose.msra.mxu0 %v1651
        %1669 = vmatprep.subr.bf16.mxu0 0
        %1670 = vmatpush2.bf16.xpose.msra.mxu0 0
        %1671 = vmatprep.subr.bf16.mxu0 0
        %1672 = vmatpush2.bf16.xpose.msra.mxu0 0
        %1673 = vmatprep.subr.bf16.mxu0 0
        %1674 = vmatpush2.bf16.xpose.msra.mxu0 0
        %1675 = vmatprep.subr.bf16.mxu0 0
        %1676 = vmatpush2.bf16.xpose.msra.mxu0 0
        %1677 = vmatprep.subr.bf16.mxu0 0
        %1678 = vmatpush2.bf16.xpose.msra.mxu0 0
        %1679 = vmatprep.subr.bf16.mxu0 0
        %1680 = vmatpush2.bf16.xpose.msra.mxu0 0
        %1681 = vmatprep.subr.bf16.mxu0 0
        %1682 = vmatpush2.bf16.xpose.msra.mxu0 0
        %1683 = vmatprep.subr.bf16.mxu0 0
        %1684 = vmatpush2.bf16.xpose.msra.mxu0 0
        %1685 = vmatprep.mubr.bf16.mxu0 0
        %1686 = vmatmul.mubr.bf16.gmra.mxu0 %v1648
        %v1687 = vpop.f32.mrf.mxu0
        %v1688 = vadd.f32 0.0, %v1687
        %v1689 = vpop.f32.mrf.mxu0
        %v1690 = vpop.f32.mrf.mxu0
        %v1691 = vpop.f32.mrf.mxu0
        %1692 = vdwg.mxu0
        %v1693 = vmul.f32 %v1688, 0.25
        %v1694 = vsel %vm1339, %v1693, -inf
        %1695 = vmax.xlane.f32.xlu0 %v1694
        %v1696 = vpop.xlane.xlu0 %1695
        %v1697 = vsub.f32 %v1693, %v1696
        %v1698 = vmul.f32 %v1697, 1.442695
        %v1699 = vpow.pop %v1698
        %v1700 = vsel %vm1339, %v1699, 0.0
        %1701 = vadd.xlane.f32.xlu0 %v1700
        %v1702 = vpop.xlane.xlu0 %1701
        %v1703 = vrcp.pop %v1702
        %v1704 = vmul.f32 %v1699, %v1703
        %v1705 = vpack.c.bf16 %v1704, %v1704
        %1706 = vrot.lane.b32.xlu0 %v915, 80
        %v1707 = vpop.permute.xlu0 %1706
        %v1709 = vsel %vm1339, %v1705, 0
        %v1712 = vsel %vm1003, %v1707, 0
        %1714 = vmatprep.subr.bf16.mxu0 0
        %1715 = vmatpush1.bf16.msra.mxu0 0
        %1716 = vmatprep.subr.bf16.mxu0 0
        %1717 = vmatpush1.bf16.msra.mxu0 0
        %1718 = vmatprep.subr.bf16.mxu0 0
        %1719 = vmatpush1.bf16.msra.mxu0 0
        %1720 = vmatprep.subr.bf16.mxu0 0
        %1721 = vmatpush1.bf16.msra.mxu0 0
        %1722 = vmatprep.subr.bf16.mxu0 0
        %1723 = vmatpush1.bf16.msra.mxu0 0
        %1724 = vmatprep.subr.bf16.mxu0 0
        %1725 = vmatpush1.bf16.msra.mxu0 0
        %1726 = vmatprep.subr.bf16.mxu0 0
        %1727 = vmatpush1.bf16.msra.mxu0 0
        %1728 = vmatprep.subr.bf16.mxu0 0
        %1729 = vmatpush1.bf16.msra.mxu0 %v1712
        %1730 = vmatprep.subr.bf16.mxu0 0
        %1731 = vmatpush2.bf16.msra.mxu0 0
        %1732 = vmatprep.subr.bf16.mxu0 0
        %1733 = vmatpush2.bf16.msra.mxu0 0
        %1734 = vmatprep.subr.bf16.mxu0 0
        %1735 = vmatpush2.bf16.msra.mxu0 0
        %1736 = vmatprep.subr.bf16.mxu0 0
        %1737 = vmatpush2.bf16.msra.mxu0 0
        %1738 = vmatprep.subr.bf16.mxu0 0
        %1739 = vmatpush2.bf16.msra.mxu0 0
        %1740 = vmatprep.subr.bf16.mxu0 0
        %1741 = vmatpush2.bf16.msra.mxu0 0
        %1742 = vmatprep.subr.bf16.mxu0 0
        %1743 = vmatpush2.bf16.msra.mxu0 0
        %1744 = vmatprep.subr.bf16.mxu0 0
        %1745 = vmatpush2.bf16.msra.mxu0 0
        %1746 = vmatprep.mubr.bf16.mxu0 0
        %1747 = vmatmul.mubr.bf16.gmra.mxu0 %v1709
        %v1748 = vpop.f32.mrf.mxu0
        %v1749 = vadd.f32 0.0, %v1748
        %v1750 = vpop.f32.mrf.mxu0
        %v1751 = vpop.f32.mrf.mxu0
        %v1752 = vpop.f32.mrf.mxu0
        %1753 = vdwg.mxu0
        %v1754 = vpack.c.bf16 %v1749, %v1749
        %v1756 = vunpack.c.l.b16 %v1754
        %v1757 = vpack.c.b16 %v1756, %v1756
        %1758 = vrot.lane.b32.xlu0 %v1757, 48
        %v1759 = vpop.permute.xlu0 %1758
        %vm1761 = vcmask 519552
        %1762 = vst.msk [vmem:[#allocation3] sm:$0xf] %vm1761, %v1759
        %v1763 = vld [vmem:[#allocation3] sm:$0xf]
        %v1764 = vld [vmem:[%s640] sm:$0xf]
        %v1765 = vld [vmem:[%s640 + $0x4] sm:$0xf]
        %v1766 = vld [vmem:[%s640 + $0x8] sm:$0xf]
        %v1767 = vld [vmem:[%s640 + $0xc] sm:$0xf]
        %v1768 = vld [vmem:[%s640 + $0x10] sm:$0xf]
        %v1769 = vld [vmem:[%s640 + $0x14] sm:$0xf]
        %v1770 = vld [vmem:[%s640 + $0x18] sm:$0xf]
        %v1771 = vld [vmem:[%s640 + $0x1c] sm:$0xf]
        %v1780 = vunpack.c.l.b16 %v1764
        %v1781 = vunpack.c.l.b16 %v1765
        %v1782 = vunpack.c.l.b16 %v1766
        %v1783 = vunpack.c.l.b16 %v1767
        %v1784 = vunpack.c.l.b16 %v1768
        %v1785 = vunpack.c.l.b16 %v1769
        %v1786 = vunpack.c.l.b16 %v1770
        %v1787 = vunpack.c.l.b16 %v1771
        %v1788 = vpack.c.b16 %v1781, %v1780
        %v1789 = vpack.c.b16 %v1783, %v1782
        %v1790 = vpack.c.b16 %v1785, %v1784
        %v1791 = vpack.c.b16 %v1787, %v1786
        %v1797 = vsel %vm734, %v1763, 0
        %1799 = vmatprep.subr.bf16.mxu0 0
        %1800 = vmatpush1.bf16.msra.mxu0 0
        %1801 = vmatprep.subr.bf16.mxu0 0
        %1802 = vmatpush1.bf16.msra.mxu0 0
        %1803 = vmatprep.subr.bf16.mxu0 0
        %1804 = vmatpush1.bf16.msra.mxu0 0
        %1805 = vmatprep.subr.bf16.mxu0 0
        %1806 = vmatpush1.bf16.msra.mxu0 0
        %1807 = vmatprep.subr.bf16.mxu0 0
        %1808 = vmatpush1.bf16.msra.mxu0 %v1791
        %1809 = vmatprep.subr.bf16.mxu0 0
        %1810 = vmatpush1.bf16.msra.mxu0 %v1790
        %1811 = vmatprep.subr.bf16.mxu0 0
        %1812 = vmatpush1.bf16.msra.mxu0 %v1789
        %1813 = vmatprep.subr.bf16.mxu0 0
        %1814 = vmatpush1.bf16.msra.mxu0 %v1788
        %1815 = vmatprep.subr.bf16.mxu0 0
        %1816 = vmatpush2.bf16.msra.mxu0 0
        %1817 = vmatprep.subr.bf16.mxu0 0
        %1818 = vmatpush2.bf16.msra.mxu0 0
        %1819 = vmatprep.subr.bf16.mxu0 0
        %1820 = vmatpush2.bf16.msra.mxu0 0
        %1821 = vmatprep.subr.bf16.mxu0 0
        %1822 = vmatpush2.bf16.msra.mxu0 0
        %1823 = vmatprep.subr.bf16.mxu0 0
        %1824 = vmatpush2.bf16.msra.mxu0 0
        %1825 = vmatprep.subr.bf16.mxu0 0
        %1826 = vmatpush2.bf16.msra.mxu0 0
        %1827 = vmatprep.subr.bf16.mxu0 0
        %1828 = vmatpush2.bf16.msra.mxu0 0
        %1829 = vmatprep.subr.bf16.mxu0 0
        %1830 = vmatpush2.bf16.msra.mxu0 0
        %1831 = vmatprep.mubr.bf16.mxu0 0
        %1832 = vmatmul.mubr.bf16.gmra.mxu0 %v1797
        %v1833 = vpop.f32.mrf.mxu0
        %v1834 = vadd.f32 0.0, %v1833
        %v1835 = vpop.f32.mrf.mxu0
        %v1836 = vpop.f32.mrf.mxu0
        %v1837 = vpop.f32.mrf.mxu0
        %1838 = vdwg.mxu0
        %v1839 = vadd.f32 %v727, %v1834
        %v1840 = vmul.f32 %v1839, %v1839
        %v1841 = vsel %vm734, %v1840, 0.0
        %1842 = vadd.xlane.f32.xlu0 %v1841
        %v1843 = vpop.xlane.xlu0 %1842
        %v1844 = vmul.f32 %v1843, %v738
        %v1845 = vadd.f32 %v1844, 1e-05
        %v1846 = vrsqrt.pop %v1845
        %v1847 = vmul.f32 %v1839, %v1846
        %v1848 = vmul.f32 %v1847, %v747
        %v1849 = vpack.c.bf16 %v1848, %v1848
        %v1850 = vld [vmem:[%s645] sm:$0xff]
        %v1851 = vld [vmem:[%s645 + $0x8] sm:$0xff]
        %v1852 = vld [vmem:[%s645 + $0x10] sm:$0xff]
        %v1853 = vld [vmem:[%s645 + $0x18] sm:$0xff]
        %v1854 = vld [vmem:[%s645 + $0x20] sm:$0xff]
        %v1855 = vld [vmem:[%s645 + $0x28] sm:$0xff]
        %v1856 = vld [vmem:[%s645 + $0x30] sm:$0xff]
        %v1857 = vld [vmem:[%s645 + $0x38] sm:$0xff]
        %v1866 = vunpack.c.l.b16 %v1850
        %v1867 = vunpack.c.h.b16 %v1850
        %v1868 = vunpack.c.l.b16 %v1851
        %v1869 = vunpack.c.h.b16 %v1851
        %v1870 = vunpack.c.l.b16 %v1852
        %v1871 = vunpack.c.h.b16 %v1852
        %v1872 = vunpack.c.l.b16 %v1853
        %v1873 = vunpack.c.h.b16 %v1853
        %v1874 = vunpack.c.l.b16 %v1854
        %v1875 = vunpack.c.h.b16 %v1854
        %v1876 = vunpack.c.l.b16 %v1855
        %v1877 = vunpack.c.h.b16 %v1855
        %v1878 = vunpack.c.l.b16 %v1856
        %v1879 = vunpack.c.h.b16 %v1856
        %v1880 = vunpack.c.l.b16 %v1857
        %v1881 = vunpack.c.h.b16 %v1857
        %v1882 = vpack.c.b16 %v1868, %v1866
        %v1883 = vpack.c.b16 %v1869, %v1867
        %v1884 = vpack.c.b16 %v1872, %v1870
        %v1885 = vpack.c.b16 %v1873, %v1871
        %v1886 = vpack.c.b16 %v1876, %v1874
        %v1887 = vpack.c.b16 %v1877, %v1875
        %v1888 = vpack.c.b16 %v1880, %v1878
        %v1889 = vpack.c.b16 %v1881, %v1879
        %v1899 = vsel %vm734, %v1849, 0
        %1901 = vmatprep.subr.bf16.mxu0 0
        %1902 = vmatpush1.bf16.msra.mxu0 0
        %1903 = vmatprep.subr.bf16.mxu0 0
        %1904 = vmatpush1.bf16.msra.mxu0 0
        %1905 = vmatprep.subr.bf16.mxu0 0
        %1906 = vmatpush1.bf16.msra.mxu0 0
        %1907 = vmatprep.subr.bf16.mxu0 0
        %1908 = vmatpush1.bf16.msra.mxu0 0
        %1909 = vmatprep.subr.bf16.mxu0 %v1889
        %1910 = vmatpush1.bf16.msra.mxu0 %v1888
        %1911 = vmatprep.subr.bf16.mxu0 %v1887
        %1912 = vmatpush1.bf16.msra.mxu0 %v1886
        %1913 = vmatprep.subr.bf16.mxu0 %v1885
        %1914 = vmatpush1.bf16.msra.mxu0 %v1884
        %1915 = vmatprep.subr.bf16.mxu0 %v1883
        %1916 = vmatpush1.bf16.msra.mxu0 %v1882
        %1917 = vmatprep.subr.bf16.mxu0 0
        %1918 = vmatpush2.bf16.msra.mxu0 0
        %1919 = vmatprep.subr.bf16.mxu0 0
        %1920 = vmatpush2.bf16.msra.mxu0 0
        %1921 = vmatprep.subr.bf16.mxu0 0
        %1922 = vmatpush2.bf16.msra.mxu0 0
        %1923 = vmatprep.subr.bf16.mxu0 0
        %1924 = vmatpush2.bf16.msra.mxu0 0
        %1925 = vmatprep.subr.bf16.mxu0 0
        %1926 = vmatpush2.bf16.msra.mxu0 0
        %1927 = vmatprep.subr.bf16.mxu0 0
        %1928 = vmatpush2.bf16.msra.mxu0 0
        %1929 = vmatprep.subr.bf16.mxu0 0
        %1930 = vmatpush2.bf16.msra.mxu0 0
        %1931 = vmatprep.subr.bf16.mxu0 0
        %1932 = vmatpush2.bf16.msra.mxu0 0
        %1933 = vmatprep.mubr.bf16.mxu0 0
        %1934 = vmatmul.mubr.bf16.gmra.mxu0 %v1899
        %v1935 = vpop.f32.mrf.mxu0
        %v1936 = vadd.f32 0.0, %v1935
        %v1937 = vpop.f32.mrf.mxu0
        %v1938 = vadd.f32 0.0, %v1937
        %v1939 = vpop.f32.mrf.mxu0
        %v1940 = vpop.f32.mrf.mxu0
        %1941 = vdwg.mxu0
        %v1942 = vmax.f32 %v1936, 0.0
        %v1943 = vmax.f32 %v1938, 0.0
        %v1944 = vmul.f32 %v1942, %v1942
        %v1945 = vmul.f32 %v1943, %v1943
        %v1946 = vpack.c.bf16 %v1944, %v1944
        %v1947 = vpack.c.bf16 %v1945, %v1945
        %v1948 = vld [vmem:[%s650] sm:$0xf]
        %v1949 = vld [vmem:[%s650 + $0x4] sm:$0xf]
        %v1950 = vld [vmem:[%s650 + $0x8] sm:$0xf]
        %v1951 = vld [vmem:[%s650 + $0xc] sm:$0xf]
        %v1952 = vld [vmem:[%s650 + $0x10] sm:$0xf]
        %v1953 = vld [vmem:[%s650 + $0x14] sm:$0xf]
        %v1954 = vld [vmem:[%s650 + $0x18] sm:$0xf]
        %v1955 = vld [vmem:[%s650 + $0x1c] sm:$0xf]
        %v1956 = vld [vmem:[%s650 + $0x20] sm:$0xf]
        %v1957 = vld [vmem:[%s650 + $0x24] sm:$0xf]
        %v1958 = vld [vmem:[%s650 + $0x28] sm:$0xf]
        %v1959 = vld [vmem:[%s650 + $0x2c] sm:$0xf]
        %v1960 = vld [vmem:[%s650 + $0x30] sm:$0xf]
        %v1961 = vld [vmem:[%s650 + $0x34] sm:$0xf]
        %v1962 = vld [vmem:[%s650 + $0x38] sm:$0xf]
        %v1963 = vld [vmem:[%s650 + $0x3c] sm:$0xf]
        %v1964 = vld [vmem:[%s650 + $0x40] sm:$0xf]
        %v1965 = vld [vmem:[%s650 + $0x44] sm:$0xf]
        %v1966 = vld [vmem:[%s650 + $0x48] sm:$0xf]
        %v1967 = vld [vmem:[%s650 + $0x4c] sm:$0xf]
        %v1968 = vld [vmem:[%s650 + $0x50] sm:$0xf]
        %v1969 = vld [vmem:[%s650 + $0x54] sm:$0xf]
        %v1970 = vld [vmem:[%s650 + $0x58] sm:$0xf]
        %v1971 = vld [vmem:[%s650 + $0x5c] sm:$0xf]
        %v1972 = vld [vmem:[%s650 + $0x60] sm:$0xf]
        %v1973 = vld [vmem:[%s650 + $0x64] sm:$0xf]
        %v1974 = vld [vmem:[%s650 + $0x68] sm:$0xf]
        %v1975 = vld [vmem:[%s650 + $0x6c] sm:$0xf]
        %v1976 = vld [vmem:[%s650 + $0x70] sm:$0xf]
        %v1977 = vld [vmem:[%s650 + $0x74] sm:$0xf]
        %v1978 = vld [vmem:[%s650 + $0x78] sm:$0xf]
        %v1979 = vld [vmem:[%s650 + $0x7c] sm:$0xf]
        %v2012 = vunpack.c.l.b16 %v1948
        %v2013 = vunpack.c.l.b16 %v1949
        %v2014 = vunpack.c.l.b16 %v1950
        %v2015 = vunpack.c.l.b16 %v1951
        %v2016 = vunpack.c.l.b16 %v1952
        %v2017 = vunpack.c.l.b16 %v1953
        %v2018 = vunpack.c.l.b16 %v1954
        %v2019 = vunpack.c.l.b16 %v1955
        %v2020 = vunpack.c.l.b16 %v1956
        %v2021 = vunpack.c.l.b16 %v1957
        %v2022 = vunpack.c.l.b16 %v1958
        %v2023 = vunpack.c.l.b16 %v1959
        %v2024 = vunpack.c.l.b16 %v1960
        %v2025 = vunpack.c.l.b16 %v1961
        %v2026 = vunpack.c.l.b16 %v1962
        %v2027 = vunpack.c.l.b16 %v1963
        %v2028 = vunpack.c.l.b16 %v1964
        %v2029 = vunpack.c.l.b16 %v1965
        %v2030 = vunpack.c.l.b16 %v1966
        %v2031 = vunpack.c.l.b16 %v1967
        %v2032 = vunpack.c.l.b16 %v1968
        %v2033 = vunpack.c.l.b16 %v1969
        %v2034 = vunpack.c.l.b16 %v1970
        %v2035 = vunpack.c.l.b16 %v1971
        %v2036 = vunpack.c.l.b16 %v1972
        %v2037 = vunpack.c.l.b16 %v1973
        %v2038 = vunpack.c.l.b16 %v1974
        %v2039 = vunpack.c.l.b16 %v1975
        %v2040 = vunpack.c.l.b16 %v1976
        %v2041 = vunpack.c.l.b16 %v1977
        %v2042 = vunpack.c.l.b16 %v1978
        %v2043 = vunpack.c.l.b16 %v1979
        %v2044 = vpack.c.b16 %v2013, %v2012
        %v2045 = vpack.c.b16 %v2015, %v2014
        %v2046 = vpack.c.b16 %v2017, %v2016
        %v2047 = vpack.c.b16 %v2019, %v2018
        %v2048 = vpack.c.b16 %v2021, %v2020
        %v2049 = vpack.c.b16 %v2023, %v2022
        %v2050 = vpack.c.b16 %v2025, %v2024
        %v2051 = vpack.c.b16 %v2027, %v2026
        %v2052 = vpack.c.b16 %v2029, %v2028
        %v2053 = vpack.c.b16 %v2031, %v2030
        %v2054 = vpack.c.b16 %v2033, %v2032
        %v2055 = vpack.c.b16 %v2035, %v2034
        %v2056 = vpack.c.b16 %v2037, %v2036
        %v2057 = vpack.c.b16 %v2039, %v2038
        %v2058 = vpack.c.b16 %v2041, %v2040
        %v2059 = vpack.c.b16 %v2043, %v2042
        %2076 = vmatprep.subr.bf16.mxu0 0
        %2077 = vmatpush1.bf16.msra.mxu0 %v2051
        %2078 = vmatprep.subr.bf16.mxu0 0
        %2079 = vmatpush1.bf16.msra.mxu0 %v2050
        %2080 = vmatprep.subr.bf16.mxu0 0
        %2081 = vmatpush1.bf16.msra.mxu0 %v2049
        %2082 = vmatprep.subr.bf16.mxu0 0
        %2083 = vmatpush1.bf16.msra.mxu0 %v2048
        %2084 = vmatprep.subr.bf16.mxu0 0
        %2085 = vmatpush1.bf16.msra.mxu0 %v2047
        %2086 = vmatprep.subr.bf16.mxu0 0
        %2087 = vmatpush1.bf16.msra.mxu0 %v2046
        %2088 = vmatprep.subr.bf16.mxu0 0
        %2089 = vmatpush1.bf16.msra.mxu0 %v2045
        %2090 = vmatprep.subr.bf16.mxu0 0
        %2091 = vmatpush1.bf16.msra.mxu0 %v2044
        %2092 = vmatprep.subr.bf16.mxu0 0
        %2093 = vmatpush2.bf16.msra.mxu0 %v2059
        %2094 = vmatprep.subr.bf16.mxu0 0
        %2095 = vmatpush2.bf16.msra.mxu0 %v2058
        %2096 = vmatprep.subr.bf16.mxu0 0
        %2097 = vmatpush2.bf16.msra.mxu0 %v2057
        %2098 = vmatprep.subr.bf16.mxu0 0
        %2099 = vmatpush2.bf16.msra.mxu0 %v2056
        %2100 = vmatprep.subr.bf16.mxu0 0
        %2101 = vmatpush2.bf16.msra.mxu0 %v2055
        %2102 = vmatprep.subr.bf16.mxu0 0
        %2103 = vmatpush2.bf16.msra.mxu0 %v2054
        %2104 = vmatprep.subr.bf16.mxu0 0
        %2105 = vmatpush2.bf16.msra.mxu0 %v2053
        %2106 = vmatprep.subr.bf16.mxu0 0
        %2107 = vmatpush2.bf16.msra.mxu0 %v2052
        %2108 = vmatprep.mubr.bf16.mxu0 %v1947
        %2109 = vmatmul.mubr.bf16.gmra.mxu0 %v1946
        %v2110 = vpop.f32.mrf.mxu0
        %v2111 = vadd.f32 0.0, %v2110
        %v2112 = vpop.f32.mrf.mxu0
        %v2113 = vpop.f32.mrf.mxu0
        %v2114 = vpop.f32.mrf.mxu0
        %2115 = vdwg.mxu0
        %v2116 = vadd.f32 %v1839, %v2111
        %2117 = vst.msk [vmem:[#allocation2] sm:$0xff] %vm734, %v2116
        %p2118 = scmp.eq.s32.totalorder %s35, 1
        // Predicated region
        $region89: #{tpu_custom_call.1} parent=83 // pred_check
          %p2119 = pneg %p2118
        $region90: #{tpu_custom_call.1} parent=83 // pred_check_branch
          %2121 = sbr.rel (%p2119) target = $region92
        $region91: #{tpu_custom_call.1} parent=83 // pred_region
          %v2122 = vsel %vm734, %v2116, 0.0
          %2123 = vadd.xlane.f32.xlu0 %v2122
          %v2124 = vpop.xlane.xlu0 %2123
          %v2125 = vmul.f32 %v2124, %v738
          %v2126 = vsub.f32 %v2116, %v2125
          %v2127 = vmul.f32 %v2126, %v2126
          %v2128 = vsel %vm734, %v2127, 0.0
          %2129 = vadd.xlane.f32.xlu0 %v2128
          %v2130 = vpop.xlane.xlu0 %2129
          %v2131 = vmul.f32 %v2130, %v738
          %v2132 = vadd.f32 %v2131, 1e-05
          %v2133 = vrsqrt.pop %v2132
          %v2134 = vmul.f32 %v2126, %v2133
          %v2135 = vld [vmem:[%s14] sm:$0x1]
          %v2137 = vlaneseq
          %v2138 = vshrl.u32 %v2137, 7
          %v2139 = vsub.s32 0, %v2138
          %v2140 = vrot.slane %v2135, %v2139
          %v2142 = vmul.f32 %v2134, %v2140
          %v2143 = vld [vmem:[%s15] sm:$0x1]
          %v2145 = vlaneseq
          %v2146 = vshrl.u32 %v2145, 7
          %v2147 = vsub.s32 0, %v2146
          %v2148 = vrot.slane %v2143, %v2147
          %v2150 = vadd.f32 %v2142, %v2148
          %2151 = vst.msk [vmem:[%s617] sm:$0xff] %vm734, %v2150
        $region92: #{tpu_custom_call.1} parent=83 // pred_fallthru
          _
        %s2152 = sand.u32 %s426, 1
        %s2153 = scalar_lea.sflag [#allocation5], %s2152
        %s2154 = sand.u32 %s426, 1
        %s2155 = smul.addr %s2154, 8
        %s2156 = scalar_lea.vmem [#allocation4], %s2155
        // Predicated region
        $region93: #{tpu_custom_call.1} parent=83 // pred_check
          %p2157 = pneg %p436
        $region94: #{tpu_custom_call.1} parent=83 // pred_check_branch
          %2159 = sbr.rel (%p2157) target = $region96
        $region95: #{tpu_custom_call.1} parent=83 // pred_region
          %s2161 = ssub.s32 128, 128
          %2162 = vsyncadd %s2153, %s2161
          %s2163 = smul.addr %s34, 128
          %s2164 = scalar_lea.hbm %s16, %s2163
          %s2166 = sshll.u32 %s2156, 4
          %s2167 = int_to_ptr.vmem [resolvable:$true] %s2166
          %2169 = dma.vmem_to_hbm [thread:$0]  %s2167, 128, %s2164, %s2153
        $region96: #{tpu_custom_call.1} parent=83 // pred_fallthru
          _
      $region84: #{tpu_custom_call.1} parent=5 // pred_fallthru
        _
      %p2170 = scmp.le.s32.totalorder 2, %s25
      // Predicated region
      $region97: #{tpu_custom_call.1} parent=5 // pred_check
        %p2171 = pneg %p2170
      $region98: #{tpu_custom_call.1} parent=5 // pred_check_branch
        %2173 = sbr.rel (%p2171) target = $region100
      $region99: #{tpu_custom_call.1} parent=5 // pred_region
        %s2174 = ssub.s32 %s25, 2
        // Predicated region
        $region101: #{tpu_custom_call.1} parent=99 // pred_check
          %p2175 = pneg %p442
        $region102: #{tpu_custom_call.1} parent=99 // pred_check_branch
          %2177 = sbr.rel (%p2175) target = $region104
        $region103: #{tpu_custom_call.1} parent=99 // pred_region
          %s2178 = sand.u32 %s427, 1
          %s2179 = scalar_lea.sflag [#allocation5], %s2178
          %s2180 = sand.u32 %s427, 1
          %s2181 = smul.addr %s2180, 8
          %s2182 = scalar_lea.vmem [#allocation4], %s2181
          %2183 = dma.done %s2179, 128
        $region104: #{tpu_custom_call.1} parent=99 // pred_fallthru
          _
      $region100: #{tpu_custom_call.1} parent=5 // pred_fallthru
        _
    $region6: #{tpu_custom_call.1} parent=1 // loop_footer
      %s29 = sadd.s32 1, %s25
    $region7: #{tpu_custom_call.1} parent=1 // loop_footer_branch
      %24 = sbr.rel target = $region3
    $region8: #{tpu_custom_call.1} parent=1 // loop_exit
      _
    %2184 = vsyncpa [#allocation5], 1
    %s2185 = scalar_lea.sflag [#allocation5], 1
    %2186 = vsyncpa %s2185, 1

</llo_original>
